<compile_context>
chip_gen: v5e
topology: v5e:2x2
jax: 0.10.0
libtpu: 0.0.40
codegen_flags: <defaults>
</compile_context>

<pallas_src>
import functools

import jax
import jax.numpy as jnp
from jax.experimental import pallas as pl
from jax.experimental.pallas import tpu as pltpu


def attention_kernel(x_ref, wsel_ref, expand_ref, o_ref, acc_ref, *, bsz):
    """Fused Linear(H,1) -> softmax(dim=1) -> weighted-sum for one (tS, B*H) tile.

    x_ref      : (tS, B*H)  input tile, native dtype (lane-dense when B*H % 128 == 0)
    wsel_ref   : (B*H, Bp)  wsel[b*H+h, c] = w[h] * (c == b)   (f32, VMEM-resident)
    expand_ref : (Bp, B*H)  expand[c, b*H+h] = (c == b)        (f32, VMEM-resident)
    o_ref      : (1, B*H)   output block (same block for every grid step)
    acc_ref    : (1, B*H)   f32 VMEM accumulator across the S grid axis
    """
    step = pl.program_id(0)

    @pl.when(step == 0)
    def _init():
        acc_ref[...] = jnp.zeros_like(acc_ref)

    # Cast in-kernel: bf16 inputs are DMA'd as bf16 (half the HBM bytes).
    x = x_ref[...].astype(jnp.float32)                               # (tS, B*H)

    # ---- Linear(H, 1) logits for every example at once: one MXU matmul ----------
    # logits[s, c] = sum_h x[s, c, h] * w[h]  for c < B;  0 on the padded lanes.
    logits = jnp.dot(x, wsel_ref[...],
                     precision=jax.lax.Precision.HIGHEST,
                     preferred_element_type=jnp.float32)             # (tS, Bp)

    # ---- softmax over the batch axis (dim=1 of the (S, B, 1) logits) ------------
    # The Linear bias shifts every logit of a timestep equally, so it cancels in
    # this softmax (shift invariance) and is not computed at all.  Padded batch
    # lanes get a large negative logit so their exp() is exactly 0.
    col = jax.lax.broadcasted_iota(jnp.int32, (1, logits.shape[-1]), 1)
    logits = logits + jnp.where(col < bsz, 0.0, -1e30).astype(jnp.float32)
    m = jnp.max(logits, axis=-1, keepdims=True)                      # (tS, 1)
    e = jnp.exp(logits - m)                                          # (tS, Bp)
    denom = jnp.sum(e, axis=-1, keepdims=True)                       # (tS, 1), >= 1
    alpha = e * (1.0 / denom)                                        # packed softmax

    # ---- broadcast alpha[s, b] across example b's H lanes: second MXU matmul ----
    alpha_lanes = jnp.dot(alpha, expand_ref[...],
                          precision=jax.lax.Precision.HIGHEST,
                          preferred_element_type=jnp.float32)        # (tS, B*H)

    # ---- weighted sum over this S tile ------------------------------------------
    # Exact f32 cross-sublane reduce.  (On v6e/v7x this can optionally be moved to
    # the MXU as jnp.dot(ones((1, tS)), x * alpha_lanes) to shave XLU work.)
    acc_ref[...] += jnp.sum(x * alpha_lanes, axis=0, keepdims=True)  # (1, B*H)

    # Cheap (1, B*H) store every step; the last step's value is the full S-sum.
    o_ref[...] = acc_ref[...].astype(o_ref.dtype)


def attention_forward(hidden_state, w, b, *, block_s=512):
    """hidden_state: (S, B, H); w: (1, H) Linear weight; b: (1,) Linear bias.

    Returns (hidden_state * softmax(hidden_state @ w.T + b, dim=1)).sum(dim=0) -> (B, H).
    Note: `b` cancels exactly in the batch-axis softmax, so it never reaches the kernel.
    """
    S, B, H = hidden_state.shape
    BH = B * H
    in_dtype = hidden_state.dtype

    # Lane-dense (S, B*H) slab: free wrapper reshape.  When B*H is a multiple of 128
    # every load/store is unmasked; other shapes stay correct (just lane-sparse).
    x2d = hidden_state.reshape(S, BH)

    # S-tile sizing.  The real trade-off is per-grid-step overhead (~0.35 us/step)
    # versus in-flight VMEM -- not HBM/VMEM capacity of any generation: a
    # double-buffered 512-row f32 tile at B*H = 128 is ~0.5 MiB, far below the
    # 32 MiB scoped budget on v5e/v6e/v7x.  block_s=512 moves ~256 KiB per step;
    # small S collapses to a single step automatically.
    t_s = min(block_s, max(S, 8))
    t_s = ((t_s + 7) // 8) * 8                       # sublane multiple
    s_pad = pl.cdiv(S, t_s) * t_s
    n_steps = s_pad // t_s
    if s_pad != S:
        # Zero rows are harmless: x == 0 there, so x * alpha contributes exactly 0.
        x2d = jnp.pad(x2d, ((0, s_pad - S), (0, 0)))

    # Tiny constant selector operands, VMEM-resident across the whole grid:
    #   wsel[b*H+h, c]   = w[h] * (c == b)   -> logits      = x2d   @ wsel    (MXU)
    #   expand[c, b*H+h] = (c == b)          -> alpha_lanes = alpha @ expand  (MXU)
    B_pad = ((B + 127) // 128) * 128
    w_row = w.reshape(H).astype(jnp.float32)
    wsel = (jnp.repeat(jnp.eye(B, B_pad, dtype=jnp.float32), H, axis=0)
            * jnp.tile(w_row, B)[:, None])                              # (B*H, B_pad)
    expand = jnp.repeat(jnp.eye(B_pad, B, dtype=jnp.float32), H, axis=1)  # (B_pad, B*H)

    kernel = functools.partial(attention_kernel, bsz=B)

    out2d = pl.pallas_call(
        kernel,
        out_shape=jax.ShapeDtypeStruct((1, BH), in_dtype),
        grid=(n_steps,),
        in_specs=[
            # streamed S tiles, double-buffered by the Pallas pipeline
            pl.BlockSpec((t_s, BH), lambda i: (i, 0)),
            # selector operands: same block every step -> stay resident, no re-DMA
            pl.BlockSpec((BH, B_pad), lambda i: (0, 0)),
            pl.BlockSpec((B_pad, BH), lambda i: (0, 0)),
        ],
        out_specs=pl.BlockSpec((1, BH), lambda i: (0, 0)),
        scratch_shapes=[pltpu.VMEM((1, BH), jnp.float32)],
        compiler_params=pltpu.CompilerParams(
            # Single-TC friendly: the S axis is a pure reduction ("arbitrary").
            # On v7x (2 TensorCores) a 2-way split of S into two calls / shard_map
            # chunks can be layered on top for very large S.
            dimension_semantics=("arbitrary",),
        ),
    )(x2d, wsel, expand)

    return out2d.reshape(B, H)


def attention_reference(hidden_state, w, b):
    """Pure-JAX mirror of the PyTorch module (elementwise f32 math, no MXU dots)."""
    x = hidden_state.astype(jnp.float32)
    w32 = w.reshape(1, 1, -1).astype(jnp.float32)
    logits = jnp.sum(x * w32, axis=-1) + b.reshape(()).astype(jnp.float32)   # (S, B)
    alpha = jax.nn.softmax(logits, axis=1)            # softmax over the batch axis
    return jnp.sum(x * alpha[:, :, None], axis=0)     # (B, H), f32


if __name__ == "__main__":
    # (seq, batch, hidden) consistent with the batch_first=False GRU output that
    # feeds this module.  B*H = 128 -> fully lane-dense blocks.
    S, B, H = 64, 4, 32
    key = jax.random.PRNGKey(0)
    kx, kw, kb = jax.random.split(key, 3)

    hidden_state = jax.random.normal(kx, (S, B, H), dtype=jnp.float32)
    bound = 1.0 / (H ** 0.5)                # PyTorch Linear(H, 1) default init range
    w = jax.random.uniform(kw, (1, H), minval=-bound, maxval=bound, dtype=jnp.float32)
    b = jax.random.uniform(kb, (1,), minval=-bound, maxval=bound, dtype=jnp.float32)

    ref = attention_reference(hidden_state, w, b)

    # f32, single grid step (the whole S fits one tile)
    out = jax.block_until_ready(attention_forward(hidden_state, w, b))
    assert out.shape == (B, H)
    assert jnp.allclose(out, ref, atol=1e-3, rtol=1e-3), "f32 mismatch vs reference"

    # f32, forced multi-step grid (exercises the VMEM accumulator across steps;
    # block_s=16 is a correctness-path test, not a performance setting)
    out_ms = jax.block_until_ready(attention_forward(hidden_state, w, b, block_s=16))
    assert jnp.allclose(out_ms, ref, atol=1e-3, rtol=1e-3), "multi-step mismatch vs reference"

    # ragged S (zero-pad path) + lane-sparse B*H < 128
    S2, B2, H2 = 19, 2, 16
    hs2 = jax.random.normal(jax.random.PRNGKey(1), (S2, B2, H2), dtype=jnp.float32)
    w2 = jax.random.uniform(jax.random.PRNGKey(2), (1, H2), minval=-0.25, maxval=0.25,
                            dtype=jnp.float32)
    b2 = jnp.full((1,), 0.1, dtype=jnp.float32)
    out2 = jax.block_until_ready(attention_forward(hs2, w2, b2))
    ref2 = attention_reference(hs2, w2, b2)
    assert out2.shape == (B2, H2)
    assert jnp.allclose(out2, ref2, atol=1e-3, rtol=1e-3), "ragged/lane-sparse mismatch"

    # bf16 input: DMA'd as bf16 (half the HBM bytes), f32 math in-kernel, bf16 output
    hs_bf16 = hidden_state.astype(jnp.bfloat16)
    out_bf16 = jax.block_until_ready(attention_forward(hs_bf16, w, b))
    ref_bf16 = attention_reference(hs_bf16, w, b)
    assert out_bf16.dtype == jnp.bfloat16
    assert jnp.allclose(out_bf16.astype(jnp.float32), ref_bf16, atol=3e-2, rtol=3e-2), \
        "bf16 mismatch vs reference"

    print("KERNEL_OK")
</pallas_src>

<mosaic_0001>
module attributes {stable_mosaic.version = 11 : i64} {
  func.func @attention_kernel(%arg0: i32, %arg1: memref<64x128xf32, #tpu.memory_space<vmem>>, %arg2: memref<128x128xf32, #tpu.memory_space<vmem>>, %arg3: memref<128x128xf32, #tpu.memory_space<vmem>>, %arg4: memref<1x128xf32, #tpu.memory_space<vmem>>, %arg5: memref<1x128xf32, #tpu.memory_space<vmem>>) attributes {dimension_semantics = [#tpu.dimension_semantics<arbitrary>], iteration_bounds = array<i64: 1>, scalar_prefetch = 0 : i64, scratch_operands = 1 : i64, tpu.core_type = #tpu.core_type<tc>, window_params = [{transform_indices = @transform_0, window_bounds = array<i64: 64, 128>}, {pipeline_mode = #tpu.pipeline_mode<synchronous>, transform_indices = @transform_1, window_bounds = array<i64: 128, 128>}, {pipeline_mode = #tpu.pipeline_mode<synchronous>, transform_indices = @transform_2, window_bounds = array<i64: 128, 128>}, {pipeline_mode = #tpu.pipeline_mode<synchronous>, transform_indices = @transform_3, window_bounds = array<i64: 1, 128>}]} {
    %c0_i32 = arith.constant 0 : i32
    %0 = arith.cmpi eq, %arg0, %c0_i32 : i32
    %1 = arith.extui %0 : i1 to i32
    %c0_i32_0 = arith.constant 0 : i32
    %2 = arith.cmpi ne, %1, %c0_i32_0 : i32
    scf.if %2 {
      %cst_21 = arith.constant 0.000000e+00 : f32
      %35 = vector.broadcast %cst_21 : f32 to vector<1x128xf32>
      %c0_22 = arith.constant 0 : index
      %c0_23 = arith.constant 0 : index
      %36 = vector.load %arg5[%c0_22, %c0_23] : memref<1x128xf32, #tpu.memory_space<vmem>>, vector<1x128xf32>
      tpu.vector_store %arg5[%c0_22, %c0_23], %35 {strides = array<i32>} : memref<1x128xf32, #tpu.memory_space<vmem>>, vector<1x128xf32>,
    } else {
    }
    %c0 = arith.constant 0 : index
    %c0_1 = arith.constant 0 : index
    %3 = vector.load %arg1[%c0, %c0_1] : memref<64x128xf32, #tpu.memory_space<vmem>>, vector<64x128xf32>
    %c0_2 = arith.constant 0 : index
    %c0_3 = arith.constant 0 : index
    %4 = vector.load %arg2[%c0_2, %c0_3] : memref<128x128xf32, #tpu.memory_space<vmem>>, vector<128x128xf32>
    %cst = arith.constant dense<0.000000e+00> : vector<64x128xf32>
    %5 = tpu.matmul %3, %4, %cst {dimension_numbers = #tpu.dot_dimension_numbers<[1], [0], [0], [1], [0, 0, 1, 1], [], []>, precision = #tpu.contract_precision<fp32>} : vector<64x128xf32>, vector<128x128xf32>, vector<64x128xf32> -> vector<64x128xf32>
    %6 = tpu.iota {dimensions = array<i32: 1>} : vector<1x128xi32>
    %c4_i32 = arith.constant 4 : i32
    %7 = vector.broadcast %c4_i32 : i32 to vector<1x128xi32>
    %8 = arith.cmpi slt, %6, %7 : vector<1x128xi32>
    %cst_4 = arith.constant 0.000000e+00 : f32
    %cst_5 = arith.constant -1.000000e+30 : f32
    %9 = vector.broadcast %cst_4 : f32 to vector<1x128xf32>
    %10 = vector.broadcast %cst_5 : f32 to vector<1x128xf32>
    %11 = arith.select %8, %9, %10 : vector<1x128xi1>, vector<1x128xf32>
    %12 = vector.broadcast %11 : vector<1x128xf32> to vector<64x128xf32>
    %13 = arith.addf %5, %12 : vector<64x128xf32>
    %cst_6 = arith.constant dense<0xFF800000> : vector<64xf32>
    %14 = vector.multi_reduction <maximumf>, %13, %cst_6 [1] : vector<64x128xf32> to vector<64xf32>
    %15 = vector.shape_cast %14 : vector<64xf32> to vector<64x1xf32>
    %16 = vector.broadcast %15 : vector<64x1xf32> to vector<64x128xf32>
    %17 = arith.subf %13, %16 : vector<64x128xf32>
    %18 = math.exp %17 : vector<64x128xf32>
    %cst_7 = arith.constant dense<0.000000e+00> : vector<64xf32>
    %19 = vector.multi_reduction <add>, %18, %cst_7 [1] : vector<64x128xf32> to vector<64xf32>
    %20 = vector.shape_cast %19 : vector<64xf32> to vector<64x1xf32>
    %cst_8 = arith.constant 1.000000e+00 : f32
    %21 = vector.broadcast %cst_8 : f32 to vector<64x1xf32>
    %22 = arith.divf %21, %20 : vector<64x1xf32>
    %23 = vector.broadcast %22 : vector<64x1xf32> to vector<64x128xf32>
    %24 = arith.mulf %18, %23 : vector<64x128xf32>
    %c0_9 = arith.constant 0 : index
    %c0_10 = arith.constant 0 : index
    %25 = vector.load %arg3[%c0_9, %c0_10] : memref<128x128xf32, #tpu.memory_space<vmem>>, vector<128x128xf32>
    %cst_11 = arith.constant dense<0.000000e+00> : vector<64x128xf32>
    %26 = tpu.matmul %24, %25, %cst_11 {dimension_numbers = #tpu.dot_dimension_numbers<[1], [0], [0], [1], [0, 0, 1, 1], [], []>, precision = #tpu.contract_precision<fp32>} : vector<64x128xf32>, vector<128x128xf32>, vector<64x128xf32> -> vector<64x128xf32>
    %c0_12 = arith.constant 0 : index
    %c0_13 = arith.constant 0 : index
    %27 = vector.load %arg5[%c0_12, %c0_13] : memref<1x128xf32, #tpu.memory_space<vmem>>, vector<1x128xf32>
    %28 = arith.mulf %3, %26 : vector<64x128xf32>
    %cst_14 = arith.constant dense<0.000000e+00> : vector<128xf32>
    %29 = vector.multi_reduction <add>, %28, %cst_14 [0] : vector<64x128xf32> to vector<128xf32>
    %30 = vector.shape_cast %29 : vector<128xf32> to vector<1x128xf32>
    %31 = arith.addf %27, %30 : vector<1x128xf32>
    %c0_15 = arith.constant 0 : index
    %c0_16 = arith.constant 0 : index
    %32 = vector.load %arg5[%c0_15, %c0_16] : memref<1x128xf32, #tpu.memory_space<vmem>>, vector<1x128xf32>
    tpu.vector_store %arg5[%c0_15, %c0_16], %31 {strides = array<i32>} : memref<1x128xf32, #tpu.memory_space<vmem>>, vector<1x128xf32>,
    %c0_17 = arith.constant 0 : index
    %c0_18 = arith.constant 0 : index
    %33 = vector.load %arg5[%c0_17, %c0_18] : memref<1x128xf32, #tpu.memory_space<vmem>>, vector<1x128xf32>
    %c0_19 = arith.constant 0 : index
    %c0_20 = arith.constant 0 : index
    %34 = vector.load %arg4[%c0_19, %c0_20] : memref<1x128xf32, #tpu.memory_space<vmem>>, vector<1x128xf32>
    tpu.vector_store %arg4[%c0_19, %c0_20], %33 {strides = array<i32>} : memref<1x128xf32, #tpu.memory_space<vmem>>, vector<1x128xf32>,
    return
  }
  func.func @transform_0(%arg0: i32) -> (i32, i32) {
    %c0_i32 = arith.constant 0 : i32
    %c0_i32_0 = arith.constant 0 : i32
    return %arg0, %c0_i32 : i32, i32
  }
  func.func @transform_1(%arg0: i32) -> (i32, i32) {
    %c0_i32 = arith.constant 0 : i32
    %c0_i32_0 = arith.constant 0 : i32
    %c0_i32_1 = arith.constant 0 : i32
    return %c0_i32, %c0_i32_0 : i32, i32
  }
  func.func @transform_2(%arg0: i32) -> (i32, i32) {
    %c0_i32 = arith.constant 0 : i32
    %c0_i32_0 = arith.constant 0 : i32
    %c0_i32_1 = arith.constant 0 : i32
    return %c0_i32, %c0_i32_0 : i32, i32
  }
  func.func @transform_3(%arg0: i32) -> (i32, i32) {
    %c0_i32 = arith.constant 0 : i32
    %c0_i32_0 = arith.constant 0 : i32
    %c0_i32_1 = arith.constant 0 : i32
    return %c0_i32, %c0_i32_0 : i32, i32
  }
}

</mosaic_0001>

<llo_original>
// kernel: tpu_custom_call.1
$region0: #{tpu_custom_call.1}
  #allocation0 [shape = 'u32[]', space=smem, size = 0x4, offset = 0x4, fixed_abs, tag = 'smem constant byte address 0x4 - core index']
  #allocation1 [shape = 'u32[72,128]{1,0:T(1,128)}', space=vmem, size = 0x9000, scoped, tag = 'internal scratch']
  #allocation2 [shape = 'f32[1,128]{1,0:T(1,128)}', space=vmem, size = 0x200, scoped, tag = 'scratch operand']
  %s0 = inlined_call_operand.hbm [shape: f32[64,128], index: 0, kind: input, shape index: {}]
  %s1 = inlined_call_operand.hbm [shape: f32[128,128], index: 1, kind: input, shape index: {}]
  %s2 = inlined_call_operand.hbm [shape: f32[128,128], index: 2, kind: input, shape index: {}]
  %s3 = inlined_call_operand.hbm [shape: f32[1,128], index: 3, kind: output, shape index: {}]
  %s4 = sld [smem:[#allocation0]]
  $region38: #{tpu_custom_call.1} parent=0
    _
  %s6 = ssub.s32 1, %s4
  %s7 = scalar_select 0, %s6, %s4
  $region1: #{tpu_custom_call.1} parent=0
    #allocation3 [shape = 'u8[32768]{0}', space=vmem, size = 0x8000, scoped, tag = 'input window, operand 0, single buffered']
    #allocation4 [shape = 's32[1]{0}', space=sflag, size = 0x4, scoped, tag = 'scoped memory for tpu_custom_call.1']
    #allocation5 [shape = 's32[1]{0}', space=sflag, size = 0x4, scoped, tag = 'scoped memory for tpu_custom_call.1']
    #allocation6 [shape = 'u8[65536]{0}', space=vmem, size = 0x10000, scoped, tag = 'input window, operand 1, single buffered']
    #allocation7 [shape = 's32[1]{0}', space=sflag, size = 0x4, scoped, tag = 'scoped memory for tpu_custom_call.1']
    #allocation8 [shape = 'u8[65536]{0}', space=vmem, size = 0x10000, scoped, tag = 'input window, operand 2, single buffered']
    #allocation9 [shape = 'u8[512]{0}', space=vmem, size = 0x400, scoped, tag = 'output window, operand 0, single buffered']
    %8 = vsyncpa [#allocation4], 0
    %9 = vsyncpa [#allocation7], 0
    %10 = vsyncpa [#allocation5], 0
    // Predicated region
    $region2: #{tpu_custom_call.1} parent=1 // pred_check
      _
    $region3: #{tpu_custom_call.1} parent=1 // pred_check_branch
      %12 = sbr.rel (0) target = $region5
    $region4: #{tpu_custom_call.1} parent=1 // pred_region
      %14 = vsyncadd [#allocation4], 0
      %s15 = sshll.u32 %s0, 4
      %s16 = int_to_ptr.hbm [resolvable:$true] %s15
      %s17 = sshll.u32 [#allocation3], 4
      %s18 = int_to_ptr.vmem [resolvable:$true] %s17
      %23 = dma.hbm_to_vmem [thread:$0]  %s16, 1024, %s18, [#allocation4], 128, 128, 8
    $region5: #{tpu_custom_call.1} parent=1 // pred_fallthru
      _
    // Predicated region
    $region6: #{tpu_custom_call.1} parent=1 // pred_check
      _
    $region7: #{tpu_custom_call.1} parent=1 // pred_check_branch
      %25 = sbr.rel (0) target = $region9
    $region8: #{tpu_custom_call.1} parent=1 // pred_region
      %27 = vsyncadd [#allocation7], 0
      %s28 = sshll.u32 %s1, 4
      %s29 = int_to_ptr.hbm [resolvable:$true] %s28
      %s30 = sshll.u32 [#allocation6], 4
      %s31 = int_to_ptr.vmem [resolvable:$true] %s30
      %36 = dma.hbm_to_vmem [thread:$0]  %s29, 2048, %s31, [#allocation7], 128, 128, 8
    $region9: #{tpu_custom_call.1} parent=1 // pred_fallthru
      _
    // Predicated region
    $region10: #{tpu_custom_call.1} parent=1 // pred_check
      _
    $region11: #{tpu_custom_call.1} parent=1 // pred_check_branch
      %38 = sbr.rel (0) target = $region13
    $region12: #{tpu_custom_call.1} parent=1 // pred_region
      %40 = vsyncadd [#allocation7], 0
      %s41 = sshll.u32 %s2, 4
      %s42 = int_to_ptr.hbm [resolvable:$true] %s41
      %s43 = sshll.u32 [#allocation8], 4
      %s44 = int_to_ptr.vmem [resolvable:$true] %s43
      %49 = dma.hbm_to_vmem [thread:$0]  %s42, 2048, %s44, [#allocation7], 128, 128, 8
    $region13: #{tpu_custom_call.1} parent=1 // pred_fallthru
      _
    // Predicated region
    $region14: #{tpu_custom_call.1} parent=1 // pred_check
      _
    $region15: #{tpu_custom_call.1} parent=1 // pred_check_branch
      %51 = sbr.rel (0) target = $region17
    $region16: #{tpu_custom_call.1} parent=1 // pred_region
      %53 = dma.done [#allocation4], 1024
    $region17: #{tpu_custom_call.1} parent=1 // pred_fallthru
      _
    // Predicated region
    $region18: #{tpu_custom_call.1} parent=1 // pred_check
      _
    $region19: #{tpu_custom_call.1} parent=1 // pred_check_branch
      %55 = sbr.rel (0) target = $region21
    $region20: #{tpu_custom_call.1} parent=1 // pred_region
      %57 = dma.done [#allocation7], 2048
    $region21: #{tpu_custom_call.1} parent=1 // pred_fallthru
      _
    // Predicated region
    $region22: #{tpu_custom_call.1} parent=1 // pred_check
      _
    $region23: #{tpu_custom_call.1} parent=1 // pred_check_branch
      %59 = sbr.rel (0) target = $region25
    $region24: #{tpu_custom_call.1} parent=1 // pred_region
      %61 = dma.done [#allocation7], 2048
    $region25: #{tpu_custom_call.1} parent=1 // pred_fallthru
      _
    %p62 = scmp.eq.s32.totalorder 0, 0
    // Predicated region
    $region26: #{tpu_custom_call.1} parent=1 // pred_check
      %p63 = pneg %p62
    $region27: #{tpu_custom_call.1} parent=1 // pred_check_branch
      %65 = sbr.rel (%p63) target = $region29
    $region28: #{tpu_custom_call.1} parent=1 // pred_region
      %66 = vst [vmem:[#allocation2] sm:$0x1] 0.0
    $region29: #{tpu_custom_call.1} parent=1 // pred_fallthru
      _
    %v67 = vld [vmem:[#allocation3] sm:$0xff]
    %v68 = vld [vmem:[#allocation3 + $0x8] sm:$0xff]
    %v69 = vld [vmem:[#allocation3 + $0x10] sm:$0xff]
    %v70 = vld [vmem:[#allocation3 + $0x18] sm:$0xff]
    %v71 = vld [vmem:[#allocation3 + $0x20] sm:$0xff]
    %v72 = vld [vmem:[#allocation3 + $0x28] sm:$0xff]
    %v73 = vld [vmem:[#allocation3 + $0x30] sm:$0xff]
    %v74 = vld [vmem:[#allocation3 + $0x38] sm:$0xff]
    %v75 = vld [vmem:[#allocation6] sm:$0xff]
    %v76 = vld [vmem:[#allocation6 + $0x8] sm:$0xff]
    %v77 = vld [vmem:[#allocation6 + $0x10] sm:$0xff]
    %v78 = vld [vmem:[#allocation6 + $0x18] sm:$0xff]
    %v79 = vld [vmem:[#allocation6 + $0x20] sm:$0xff]
    %v80 = vld [vmem:[#allocation6 + $0x28] sm:$0xff]
    %v81 = vld [vmem:[#allocation6 + $0x30] sm:$0xff]
    %v82 = vld [vmem:[#allocation6 + $0x38] sm:$0xff]
    %v83 = vld [vmem:[#allocation6 + $0x40] sm:$0xff]
    %v84 = vld [vmem:[#allocation6 + $0x48] sm:$0xff]
    %v85 = vld [vmem:[#allocation6 + $0x50] sm:$0xff]
    %v86 = vld [vmem:[#allocation6 + $0x58] sm:$0xff]
    %v87 = vld [vmem:[#allocation6 + $0x60] sm:$0xff]
    %v88 = vld [vmem:[#allocation6 + $0x68] sm:$0xff]
    %v89 = vld [vmem:[#allocation6 + $0x70] sm:$0xff]
    %v90 = vld [vmem:[#allocation6 + $0x78] sm:$0xff]
    %v91 = vlaneseq
    %v92 = vand.u32 %v91, 127
    %vm93 = vcmp.lt.s32.totalorder %v92, 4
    %v94 = vsel %vm93, 0.0, -1e+30
    %v95 = vand.u32 %v90, 4294901760
    %96 = vmatpush.msra.mxu0 %v95
    %v97 = vand.u32 %v89, 4294901760
    %98 = vmatpush.msra.mxu0 %v97
    %v99 = vand.u32 %v88, 4294901760
    %100 = vmatpush.msra.mxu0 %v99
    %v101 = vand.u32 %v87, 4294901760
    %102 = vmatpush.msra.mxu0 %v101
    %v103 = vand.u32 %v86, 4294901760
    %104 = vmatpush.msra.mxu0 %v103
    %v105 = vand.u32 %v85, 4294901760
    %106 = vmatpush.msra.mxu0 %v105
    %v107 = vand.u32 %v84, 4294901760
    %108 = vmatpush.msra.mxu0 %v107
    %v109 = vand.u32 %v83, 4294901760
    %110 = vmatpush.msra.mxu0 %v109
    %v111 = vand.u32 %v82, 4294901760
    %112 = vmatpush.msra.mxu0 %v111
    %v113 = vand.u32 %v81, 4294901760
    %114 = vmatpush.msra.mxu0 %v113
    %v115 = vand.u32 %v80, 4294901760
    %116 = vmatpush.msra.mxu0 %v115
    %v117 = vand.u32 %v79, 4294901760
    %118 = vmatpush.msra.mxu0 %v117
    %v119 = vand.u32 %v78, 4294901760
    %120 = vmatpush.msra.mxu0 %v119
    %v121 = vand.u32 %v77, 4294901760
    %122 = vmatpush.msra.mxu0 %v121
    %v123 = vand.u32 %v76, 4294901760
    %124 = vmatpush.msra.mxu0 %v123
    %v125 = vand.u32 %v75, 4294901760
    %126 = vmatpush.msra.mxu0 %v125
    %v127 = vand.u32 %v67, 4294901760
    %v128 = vsub.f32 %v67, %v127
    %v129 = vand.u32 %v128, 4294901760
    %v130 = vsub.f32 %v128, %v129
    %v131 = vand.u32 %v130, 4294901760
    %132 = vmatmul.f32.gmra.mxu0 %v131
    %v133 = vpop.f32.mrf.mxu0
    %v134 = vadd.f32 %v94, %v133
    %v135 = vand.u32 %v68, 4294901760
    %v136 = vsub.f32 %v68, %v135
    %v137 = vand.u32 %v136, 4294901760
    %v138 = vsub.f32 %v136, %v137
    %v139 = vand.u32 %v138, 4294901760
    %140 = vmatmul.f32.gmra.mxu0 %v139
    %v141 = vpop.f32.mrf.mxu0
    %v142 = vadd.f32 %v94, %v141
    %v143 = vand.u32 %v69, 4294901760
    %v144 = vsub.f32 %v69, %v143
    %v145 = vand.u32 %v144, 4294901760
    %v146 = vsub.f32 %v144, %v145
    %v147 = vand.u32 %v146, 4294901760
    %148 = vmatmul.f32.gmra.mxu0 %v147
    %v149 = vpop.f32.mrf.mxu0
    %v150 = vadd.f32 %v94, %v149
    %v151 = vand.u32 %v70, 4294901760
    %v152 = vsub.f32 %v70, %v151
    %v153 = vand.u32 %v152, 4294901760
    %v154 = vsub.f32 %v152, %v153
    %v155 = vand.u32 %v154, 4294901760
    %156 = vmatmul.f32.gmra.mxu0 %v155
    %v157 = vpop.f32.mrf.mxu0
    %v158 = vadd.f32 %v94, %v157
    %v159 = vand.u32 %v71, 4294901760
    %v160 = vsub.f32 %v71, %v159
    %v161 = vand.u32 %v160, 4294901760
    %v162 = vsub.f32 %v160, %v161
    %v163 = vand.u32 %v162, 4294901760
    %164 = vmatmul.f32.gmra.mxu0 %v163
    %v165 = vpop.f32.mrf.mxu0
    %v166 = vadd.f32 %v94, %v165
    %v167 = vand.u32 %v72, 4294901760
    %v168 = vsub.f32 %v72, %v167
    %v169 = vand.u32 %v168, 4294901760
    %v170 = vsub.f32 %v168, %v169
    %v171 = vand.u32 %v170, 4294901760
    %172 = vmatmul.f32.gmra.mxu0 %v171
    %v173 = vpop.f32.mrf.mxu0
    %v174 = vadd.f32 %v94, %v173
    %v175 = vand.u32 %v73, 4294901760
    %v176 = vsub.f32 %v73, %v175
    %v177 = vand.u32 %v176, 4294901760
    %v178 = vsub.f32 %v176, %v177
    %v179 = vand.u32 %v178, 4294901760
    %180 = vmatmul.f32.gmra.mxu0 %v179
    %v181 = vpop.f32.mrf.mxu0
    %v182 = vadd.f32 %v94, %v181
    %v183 = vand.u32 %v74, 4294901760
    %v184 = vsub.f32 %v74, %v183
    %v185 = vand.u32 %v184, 4294901760
    %v186 = vsub.f32 %v184, %v185
    %v187 = vand.u32 %v186, 4294901760
    %188 = vmatmul.f32.gmra.mxu0 %v187
    %v189 = vpop.f32.mrf.mxu0
    %v190 = vadd.f32 %v94, %v189
    %191 = vdwg.mxu0
    %v192 = vand.u32 %v90, 4294901760
    %v193 = vsub.f32 %v90, %v192
    %v194 = vand.u32 %v193, 4294901760
    %v195 = vsub.f32 %v193, %v194
    %v196 = vand.u32 %v195, 4294901760
    %197 = vmatpush.msra.mxu0 %v196
    %v198 = vand.u32 %v89, 4294901760
    %v199 = vsub.f32 %v89, %v198
    %v200 = vand.u32 %v199, 4294901760
    %v201 = vsub.f32 %v199, %v200
    %v202 = vand.u32 %v201, 4294901760
    %203 = vmatpush.msra.mxu0 %v202
    %v204 = vand.u32 %v88, 4294901760
    %v205 = vsub.f32 %v88, %v204
    %v206 = vand.u32 %v205, 4294901760
    %v207 = vsub.f32 %v205, %v206
    %v208 = vand.u32 %v207, 4294901760
    %209 = vmatpush.msra.mxu0 %v208
    %v210 = vand.u32 %v87, 4294901760
    %v211 = vsub.f32 %v87, %v210
    %v212 = vand.u32 %v211, 4294901760
    %v213 = vsub.f32 %v211, %v212
    %v214 = vand.u32 %v213, 4294901760
    %215 = vmatpush.msra.mxu0 %v214
    %v216 = vand.u32 %v86, 4294901760
    %v217 = vsub.f32 %v86, %v216
    %v218 = vand.u32 %v217, 4294901760
    %v219 = vsub.f32 %v217, %v218
    %v220 = vand.u32 %v219, 4294901760
    %221 = vmatpush.msra.mxu0 %v220
    %v222 = vand.u32 %v85, 4294901760
    %v223 = vsub.f32 %v85, %v222
    %v224 = vand.u32 %v223, 4294901760
    %v225 = vsub.f32 %v223, %v224
    %v226 = vand.u32 %v225, 4294901760
    %227 = vmatpush.msra.mxu0 %v226
    %v228 = vand.u32 %v84, 4294901760
    %v229 = vsub.f32 %v84, %v228
    %v230 = vand.u32 %v229, 4294901760
    %v231 = vsub.f32 %v229, %v230
    %v232 = vand.u32 %v231, 4294901760
    %233 = vmatpush.msra.mxu0 %v232
    %v234 = vand.u32 %v83, 4294901760
    %v235 = vsub.f32 %v83, %v234
    %v236 = vand.u32 %v235, 4294901760
    %v237 = vsub.f32 %v235, %v236
    %v238 = vand.u32 %v237, 4294901760
    %239 = vmatpush.msra.mxu0 %v238
    %v240 = vand.u32 %v82, 4294901760
    %v241 = vsub.f32 %v82, %v240
    %v242 = vand.u32 %v241, 4294901760
    %v243 = vsub.f32 %v241, %v242
    %v244 = vand.u32 %v243, 4294901760
    %245 = vmatpush.msra.mxu0 %v244
    %v246 = vand.u32 %v81, 4294901760
    %v247 = vsub.f32 %v81, %v246
    %v248 = vand.u32 %v247, 4294901760
    %v249 = vsub.f32 %v247, %v248
    %v250 = vand.u32 %v249, 4294901760
    %251 = vmatpush.msra.mxu0 %v250
    %v252 = vand.u32 %v80, 4294901760
    %v253 = vsub.f32 %v80, %v252
    %v254 = vand.u32 %v253, 4294901760
    %v255 = vsub.f32 %v253, %v254
    %v256 = vand.u32 %v255, 4294901760
    %257 = vmatpush.msra.mxu0 %v256
    %v258 = vand.u32 %v79, 4294901760
    %v259 = vsub.f32 %v79, %v258
    %v260 = vand.u32 %v259, 4294901760
    %v261 = vsub.f32 %v259, %v260
    %v262 = vand.u32 %v261, 4294901760
    %263 = vmatpush.msra.mxu0 %v262
    %v264 = vand.u32 %v78, 4294901760
    %v265 = vsub.f32 %v78, %v264
    %v266 = vand.u32 %v265, 4294901760
    %v267 = vsub.f32 %v265, %v266
    %v268 = vand.u32 %v267, 4294901760
    %269 = vmatpush.msra.mxu0 %v268
    %v270 = vand.u32 %v77, 4294901760
    %v271 = vsub.f32 %v77, %v270
    %v272 = vand.u32 %v271, 4294901760
    %v273 = vsub.f32 %v271, %v272
    %v274 = vand.u32 %v273, 4294901760
    %275 = vmatpush.msra.mxu0 %v274
    %v276 = vand.u32 %v76, 4294901760
    %v277 = vsub.f32 %v76, %v276
    %v278 = vand.u32 %v277, 4294901760
    %v279 = vsub.f32 %v277, %v278
    %v280 = vand.u32 %v279, 4294901760
    %281 = vmatpush.msra.mxu0 %v280
    %v282 = vand.u32 %v75, 4294901760
    %v283 = vsub.f32 %v75, %v282
    %v284 = vand.u32 %v283, 4294901760
    %v285 = vsub.f32 %v283, %v284
    %v286 = vand.u32 %v285, 4294901760
    %287 = vmatpush.msra.mxu0 %v286
    %v288 = vand.u32 %v67, 4294901760
    %289 = vmatmul.f32.gmra.mxu0 %v288
    %v290 = vpop.f32.mrf.mxu0
    %v291 = vadd.f32 %v134, %v290
    %v292 = vand.u32 %v68, 4294901760
    %293 = vmatmul.f32.gmra.mxu0 %v292
    %v294 = vpop.f32.mrf.mxu0
    %v295 = vadd.f32 %v142, %v294
    %v296 = vand.u32 %v69, 4294901760
    %297 = vmatmul.f32.gmra.mxu0 %v296
    %v298 = vpop.f32.mrf.mxu0
    %v299 = vadd.f32 %v150, %v298
    %v300 = vand.u32 %v70, 4294901760
    %301 = vmatmul.f32.gmra.mxu0 %v300
    %v302 = vpop.f32.mrf.mxu0
    %v303 = vadd.f32 %v158, %v302
    %v304 = vand.u32 %v71, 4294901760
    %305 = vmatmul.f32.gmra.mxu0 %v304
    %v306 = vpop.f32.mrf.mxu0
    %v307 = vadd.f32 %v166, %v306
    %v308 = vand.u32 %v72, 4294901760
    %309 = vmatmul.f32.gmra.mxu0 %v308
    %v310 = vpop.f32.mrf.mxu0
    %v311 = vadd.f32 %v174, %v310
    %v312 = vand.u32 %v73, 4294901760
    %313 = vmatmul.f32.gmra.mxu0 %v312
    %v314 = vpop.f32.mrf.mxu0
    %v315 = vadd.f32 %v182, %v314
    %v316 = vand.u32 %v74, 4294901760
    %317 = vmatmul.f32.gmra.mxu0 %v316
    %v318 = vpop.f32.mrf.mxu0
    %v319 = vadd.f32 %v190, %v318
    %320 = vdwg.mxu0
    %v321 = vand.u32 %v90, 4294901760
    %v322 = vsub.f32 %v90, %v321
    %323 = vmatpush.msra.mxu0 %v322
    %v324 = vand.u32 %v89, 4294901760
    %v325 = vsub.f32 %v89, %v324
    %326 = vmatpush.msra.mxu0 %v325
    %v327 = vand.u32 %v88, 4294901760
    %v328 = vsub.f32 %v88, %v327
    %329 = vmatpush.msra.mxu0 %v328
    %v330 = vand.u32 %v87, 4294901760
    %v331 = vsub.f32 %v87, %v330
    %332 = vmatpush.msra.mxu0 %v331
    %v333 = vand.u32 %v86, 4294901760
    %v334 = vsub.f32 %v86, %v333
    %335 = vmatpush.msra.mxu0 %v334
    %v336 = vand.u32 %v85, 4294901760
    %v337 = vsub.f32 %v85, %v336
    %338 = vmatpush.msra.mxu0 %v337
    %v339 = vand.u32 %v84, 4294901760
    %v340 = vsub.f32 %v84, %v339
    %341 = vmatpush.msra.mxu0 %v340
    %v342 = vand.u32 %v83, 4294901760
    %v343 = vsub.f32 %v83, %v342
    %344 = vmatpush.msra.mxu0 %v343
    %v345 = vand.u32 %v82, 4294901760
    %v346 = vsub.f32 %v82, %v345
    %347 = vmatpush.msra.mxu0 %v346
    %v348 = vand.u32 %v81, 4294901760
    %v349 = vsub.f32 %v81, %v348
    %350 = vmatpush.msra.mxu0 %v349
    %v351 = vand.u32 %v80, 4294901760
    %v352 = vsub.f32 %v80, %v351
    %353 = vmatpush.msra.mxu0 %v352
    %v354 = vand.u32 %v79, 4294901760
    %v355 = vsub.f32 %v79, %v354
    %356 = vmatpush.msra.mxu0 %v355
    %v357 = vand.u32 %v78, 4294901760
    %v358 = vsub.f32 %v78, %v357
    %359 = vmatpush.msra.mxu0 %v358
    %v360 = vand.u32 %v77, 4294901760
    %v361 = vsub.f32 %v77, %v360
    %362 = vmatpush.msra.mxu0 %v361
    %v363 = vand.u32 %v76, 4294901760
    %v364 = vsub.f32 %v76, %v363
    %365 = vmatpush.msra.mxu0 %v364
    %v366 = vand.u32 %v75, 4294901760
    %v367 = vsub.f32 %v75, %v366
    %368 = vmatpush.msra.mxu0 %v367
    %v369 = vand.u32 %v67, 4294901760
    %v370 = vsub.f32 %v67, %v369
    %371 = vmatmul.f32.gmra.mxu0 %v370
    %v372 = vpop.f32.mrf.mxu0
    %v373 = vadd.f32 %v291, %v372
    %v374 = vand.u32 %v68, 4294901760
    %v375 = vsub.f32 %v68, %v374
    %376 = vmatmul.f32.gmra.mxu0 %v375
    %v377 = vpop.f32.mrf.mxu0
    %v378 = vadd.f32 %v295, %v377
    %v379 = vand.u32 %v69, 4294901760
    %v380 = vsub.f32 %v69, %v379
    %381 = vmatmul.f32.gmra.mxu0 %v380
    %v382 = vpop.f32.mrf.mxu0
    %v383 = vadd.f32 %v299, %v382
    %v384 = vand.u32 %v70, 4294901760
    %v385 = vsub.f32 %v70, %v384
    %386 = vmatmul.f32.gmra.mxu0 %v385
    %v387 = vpop.f32.mrf.mxu0
    %v388 = vadd.f32 %v303, %v387
    %v389 = vand.u32 %v71, 4294901760
    %v390 = vsub.f32 %v71, %v389
    %391 = vmatmul.f32.gmra.mxu0 %v390
    %v392 = vpop.f32.mrf.mxu0
    %v393 = vadd.f32 %v307, %v392
    %v394 = vand.u32 %v72, 4294901760
    %v395 = vsub.f32 %v72, %v394
    %396 = vmatmul.f32.gmra.mxu0 %v395
    %v397 = vpop.f32.mrf.mxu0
    %v398 = vadd.f32 %v311, %v397
    %v399 = vand.u32 %v73, 4294901760
    %v400 = vsub.f32 %v73, %v399
    %401 = vmatmul.f32.gmra.mxu0 %v400
    %v402 = vpop.f32.mrf.mxu0
    %v403 = vadd.f32 %v315, %v402
    %v404 = vand.u32 %v74, 4294901760
    %v405 = vsub.f32 %v74, %v404
    %406 = vmatmul.f32.gmra.mxu0 %v405
    %v407 = vpop.f32.mrf.mxu0
    %v408 = vadd.f32 %v319, %v407
    %409 = vdwg.mxu0
    %v410 = vand.u32 %v90, 4294901760
    %411 = vmatpush.msra.mxu0 %v410
    %v412 = vand.u32 %v89, 4294901760
    %413 = vmatpush.msra.mxu0 %v412
    %v414 = vand.u32 %v88, 4294901760
    %415 = vmatpush.msra.mxu0 %v414
    %v416 = vand.u32 %v87, 4294901760
    %417 = vmatpush.msra.mxu0 %v416
    %v418 = vand.u32 %v86, 4294901760
    %419 = vmatpush.msra.mxu0 %v418
    %v420 = vand.u32 %v85, 4294901760
    %421 = vmatpush.msra.mxu0 %v420
    %v422 = vand.u32 %v84, 4294901760
    %423 = vmatpush.msra.mxu0 %v422
    %v424 = vand.u32 %v83, 4294901760
    %425 = vmatpush.msra.mxu0 %v424
    %v426 = vand.u32 %v82, 4294901760
    %427 = vmatpush.msra.mxu0 %v426
    %v428 = vand.u32 %v81, 4294901760
    %429 = vmatpush.msra.mxu0 %v428
    %v430 = vand.u32 %v80, 4294901760
    %431 = vmatpush.msra.mxu0 %v430
    %v432 = vand.u32 %v79, 4294901760
    %433 = vmatpush.msra.mxu0 %v432
    %v434 = vand.u32 %v78, 4294901760
    %435 = vmatpush.msra.mxu0 %v434
    %v436 = vand.u32 %v77, 4294901760
    %437 = vmatpush.msra.mxu0 %v436
    %v438 = vand.u32 %v76, 4294901760
    %439 = vmatpush.msra.mxu0 %v438
    %v440 = vand.u32 %v75, 4294901760
    %441 = vmatpush.msra.mxu0 %v440
    %v442 = vand.u32 %v67, 4294901760
    %v443 = vsub.f32 %v67, %v442
    %v444 = vand.u32 %v443, 4294901760
    %445 = vmatmul.f32.gmra.mxu0 %v444
    %v446 = vpop.f32.mrf.mxu0
    %v447 = vadd.f32 %v373, %v446
    %v448 = vand.u32 %v68, 4294901760
    %v449 = vsub.f32 %v68, %v448
    %v450 = vand.u32 %v449, 4294901760
    %451 = vmatmul.f32.gmra.mxu0 %v450
    %v452 = vpop.f32.mrf.mxu0
    %v453 = vadd.f32 %v378, %v452
    %v454 = vand.u32 %v69, 4294901760
    %v455 = vsub.f32 %v69, %v454
    %v456 = vand.u32 %v455, 4294901760
    %457 = vmatmul.f32.gmra.mxu0 %v456
    %v458 = vpop.f32.mrf.mxu0
    %v459 = vadd.f32 %v383, %v458
    %v460 = vand.u32 %v70, 4294901760
    %v461 = vsub.f32 %v70, %v460
    %v462 = vand.u32 %v461, 4294901760
    %463 = vmatmul.f32.gmra.mxu0 %v462
    %v464 = vpop.f32.mrf.mxu0
    %v465 = vadd.f32 %v388, %v464
    %v466 = vand.u32 %v71, 4294901760
    %v467 = vsub.f32 %v71, %v466
    %v468 = vand.u32 %v467, 4294901760
    %469 = vmatmul.f32.gmra.mxu0 %v468
    %v470 = vpop.f32.mrf.mxu0
    %v471 = vadd.f32 %v393, %v470
    %v472 = vand.u32 %v72, 4294901760
    %v473 = vsub.f32 %v72, %v472
    %v474 = vand.u32 %v473, 4294901760
    %475 = vmatmul.f32.gmra.mxu0 %v474
    %v476 = vpop.f32.mrf.mxu0
    %v477 = vadd.f32 %v398, %v476
    %v478 = vand.u32 %v73, 4294901760
    %v479 = vsub.f32 %v73, %v478
    %v480 = vand.u32 %v479, 4294901760
    %481 = vmatmul.f32.gmra.mxu0 %v480
    %v482 = vpop.f32.mrf.mxu0
    %v483 = vadd.f32 %v403, %v482
    %v484 = vand.u32 %v74, 4294901760
    %v485 = vsub.f32 %v74, %v484
    %v486 = vand.u32 %v485, 4294901760
    %487 = vmatmul.f32.gmra.mxu0 %v486
    %v488 = vpop.f32.mrf.mxu0
    %v489 = vadd.f32 %v408, %v488
    %490 = vdwg.mxu0
    %v491 = vand.u32 %v90, 4294901760
    %v492 = vsub.f32 %v90, %v491
    %v493 = vand.u32 %v492, 4294901760
    %494 = vmatpush.msra.mxu0 %v493
    %v495 = vand.u32 %v89, 4294901760
    %v496 = vsub.f32 %v89, %v495
    %v497 = vand.u32 %v496, 4294901760
    %498 = vmatpush.msra.mxu0 %v497
    %v499 = vand.u32 %v88, 4294901760
    %v500 = vsub.f32 %v88, %v499
    %v501 = vand.u32 %v500, 4294901760
    %502 = vmatpush.msra.mxu0 %v501
    %v503 = vand.u32 %v87, 4294901760
    %v504 = vsub.f32 %v87, %v503
    %v505 = vand.u32 %v504, 4294901760
    %506 = vmatpush.msra.mxu0 %v505
    %v507 = vand.u32 %v86, 4294901760
    %v508 = vsub.f32 %v86, %v507
    %v509 = vand.u32 %v508, 4294901760
    %510 = vmatpush.msra.mxu0 %v509
    %v511 = vand.u32 %v85, 4294901760
    %v512 = vsub.f32 %v85, %v511
    %v513 = vand.u32 %v512, 4294901760
    %514 = vmatpush.msra.mxu0 %v513
    %v515 = vand.u32 %v84, 4294901760
    %v516 = vsub.f32 %v84, %v515
    %v517 = vand.u32 %v516, 4294901760
    %518 = vmatpush.msra.mxu0 %v517
    %v519 = vand.u32 %v83, 4294901760
    %v520 = vsub.f32 %v83, %v519
    %v521 = vand.u32 %v520, 4294901760
    %522 = vmatpush.msra.mxu0 %v521
    %v523 = vand.u32 %v82, 4294901760
    %v524 = vsub.f32 %v82, %v523
    %v525 = vand.u32 %v524, 4294901760
    %526 = vmatpush.msra.mxu0 %v525
    %v527 = vand.u32 %v81, 4294901760
    %v528 = vsub.f32 %v81, %v527
    %v529 = vand.u32 %v528, 4294901760
    %530 = vmatpush.msra.mxu0 %v529
    %v531 = vand.u32 %v80, 4294901760
    %v532 = vsub.f32 %v80, %v531
    %v533 = vand.u32 %v532, 4294901760
    %534 = vmatpush.msra.mxu0 %v533
    %v535 = vand.u32 %v79, 4294901760
    %v536 = vsub.f32 %v79, %v535
    %v537 = vand.u32 %v536, 4294901760
    %538 = vmatpush.msra.mxu0 %v537
    %v539 = vand.u32 %v78, 4294901760
    %v540 = vsub.f32 %v78, %v539
    %v541 = vand.u32 %v540, 4294901760
    %542 = vmatpush.msra.mxu0 %v541
    %v543 = vand.u32 %v77, 4294901760
    %v544 = vsub.f32 %v77, %v543
    %v545 = vand.u32 %v544, 4294901760
    %546 = vmatpush.msra.mxu0 %v545
    %v547 = vand.u32 %v76, 4294901760
    %v548 = vsub.f32 %v76, %v547
    %v549 = vand.u32 %v548, 4294901760
    %550 = vmatpush.msra.mxu0 %v549
    %v551 = vand.u32 %v75, 4294901760
    %v552 = vsub.f32 %v75, %v551
    %v553 = vand.u32 %v552, 4294901760
    %554 = vmatpush.msra.mxu0 %v553
    %v555 = vand.u32 %v67, 4294901760
    %556 = vmatmul.f32.gmra.mxu0 %v555
    %v557 = vpop.f32.mrf.mxu0
    %v558 = vadd.f32 %v447, %v557
    %v559 = vand.u32 %v68, 4294901760
    %560 = vmatmul.f32.gmra.mxu0 %v559
    %v561 = vpop.f32.mrf.mxu0
    %v562 = vadd.f32 %v453, %v561
    %v563 = vand.u32 %v69, 4294901760
    %564 = vmatmul.f32.gmra.mxu0 %v563
    %v565 = vpop.f32.mrf.mxu0
    %v566 = vadd.f32 %v459, %v565
    %v567 = vand.u32 %v70, 4294901760
    %568 = vmatmul.f32.gmra.mxu0 %v567
    %v569 = vpop.f32.mrf.mxu0
    %v570 = vadd.f32 %v465, %v569
    %v571 = vand.u32 %v71, 4294901760
    %572 = vmatmul.f32.gmra.mxu0 %v571
    %v573 = vpop.f32.mrf.mxu0
    %v574 = vadd.f32 %v471, %v573
    %v575 = vand.u32 %v72, 4294901760
    %576 = vmatmul.f32.gmra.mxu0 %v575
    %v577 = vpop.f32.mrf.mxu0
    %v578 = vadd.f32 %v477, %v577
    %v579 = vand.u32 %v73, 4294901760
    %580 = vmatmul.f32.gmra.mxu0 %v579
    %v581 = vpop.f32.mrf.mxu0
    %v582 = vadd.f32 %v483, %v581
    %v583 = vand.u32 %v74, 4294901760
    %584 = vmatmul.f32.gmra.mxu0 %v583
    %v585 = vpop.f32.mrf.mxu0
    %v586 = vadd.f32 %v489, %v585
    %587 = vdwg.mxu0
    %v588 = vand.u32 %v90, 4294901760
    %589 = vmatpush.msra.mxu0 %v588
    %v590 = vand.u32 %v89, 4294901760
    %591 = vmatpush.msra.mxu0 %v590
    %v592 = vand.u32 %v88, 4294901760
    %593 = vmatpush.msra.mxu0 %v592
    %v594 = vand.u32 %v87, 4294901760
    %595 = vmatpush.msra.mxu0 %v594
    %v596 = vand.u32 %v86, 4294901760
    %597 = vmatpush.msra.mxu0 %v596
    %v598 = vand.u32 %v85, 4294901760
    %599 = vmatpush.msra.mxu0 %v598
    %v600 = vand.u32 %v84, 4294901760
    %601 = vmatpush.msra.mxu0 %v600
    %v602 = vand.u32 %v83, 4294901760
    %603 = vmatpush.msra.mxu0 %v602
    %v604 = vand.u32 %v82, 4294901760
    %605 = vmatpush.msra.mxu0 %v604
    %v606 = vand.u32 %v81, 4294901760
    %607 = vmatpush.msra.mxu0 %v606
    %v608 = vand.u32 %v80, 4294901760
    %609 = vmatpush.msra.mxu0 %v608
    %v610 = vand.u32 %v79, 4294901760
    %611 = vmatpush.msra.mxu0 %v610
    %v612 = vand.u32 %v78, 4294901760
    %613 = vmatpush.msra.mxu0 %v612
    %v614 = vand.u32 %v77, 4294901760
    %615 = vmatpush.msra.mxu0 %v614
    %v616 = vand.u32 %v76, 4294901760
    %617 = vmatpush.msra.mxu0 %v616
    %v618 = vand.u32 %v75, 4294901760
    %619 = vmatpush.msra.mxu0 %v618
    %v620 = vand.u32 %v67, 4294901760
    %621 = vmatmul.f32.gmra.mxu0 %v620
    %v622 = vpop.f32.mrf.mxu0
    %v623 = vadd.f32 %v558, %v622
    %v624 = vand.u32 %v68, 4294901760
    %625 = vmatmul.f32.gmra.mxu0 %v624
    %v626 = vpop.f32.mrf.mxu0
    %v627 = vadd.f32 %v562, %v626
    %v628 = vand.u32 %v69, 4294901760
    %629 = vmatmul.f32.gmra.mxu0 %v628
    %v630 = vpop.f32.mrf.mxu0
    %v631 = vadd.f32 %v566, %v630
    %v632 = vand.u32 %v70, 4294901760
    %633 = vmatmul.f32.gmra.mxu0 %v632
    %v634 = vpop.f32.mrf.mxu0
    %v635 = vadd.f32 %v570, %v634
    %v636 = vand.u32 %v71, 4294901760
    %637 = vmatmul.f32.gmra.mxu0 %v636
    %v638 = vpop.f32.mrf.mxu0
    %v639 = vadd.f32 %v574, %v638
    %v640 = vand.u32 %v72, 4294901760
    %641 = vmatmul.f32.gmra.mxu0 %v640
    %v642 = vpop.f32.mrf.mxu0
    %v643 = vadd.f32 %v578, %v642
    %v644 = vand.u32 %v73, 4294901760
    %645 = vmatmul.f32.gmra.mxu0 %v644
    %v646 = vpop.f32.mrf.mxu0
    %v647 = vadd.f32 %v582, %v646
    %v648 = vand.u32 %v74, 4294901760
    %649 = vmatmul.f32.gmra.mxu0 %v648
    %v650 = vpop.f32.mrf.mxu0
    %v651 = vadd.f32 %v586, %v650
    %652 = vdwg.mxu0
    %653 = vmax.xlane.f32.xlu0 %v623
    %v654 = vpop.xlane.xlu0 %653
    %655 = vmax.xlane.f32.xlu0 %v627
    %v656 = vpop.xlane.xlu0 %655
    %657 = vmax.xlane.f32.xlu0 %v631
    %v658 = vpop.xlane.xlu0 %657
    %659 = vmax.xlane.f32.xlu0 %v635
    %v660 = vpop.xlane.xlu0 %659
    %661 = vmax.xlane.f32.xlu0 %v639
    %v662 = vpop.xlane.xlu0 %661
    %663 = vmax.xlane.f32.xlu0 %v643
    %v664 = vpop.xlane.xlu0 %663
    %665 = vmax.xlane.f32.xlu0 %v647
    %v666 = vpop.xlane.xlu0 %665
    %667 = vmax.xlane.f32.xlu0 %v651
    %v668 = vpop.xlane.xlu0 %667
    %v669 = vsub.f32 %v623, %v654
    %v670 = vsub.f32 %v627, %v656
    %v671 = vsub.f32 %v631, %v658
    %v672 = vsub.f32 %v635, %v660
    %v673 = vsub.f32 %v639, %v662
    %v674 = vsub.f32 %v643, %v664
    %v675 = vsub.f32 %v647, %v666
    %v676 = vsub.f32 %v651, %v668
    %v677 = vmul.f32 %v669, 1.442695
    %v678 = vpow.pop %v677
    %v679 = vmul.f32 %v670, 1.442695
    %v680 = vpow.pop %v679
    %v681 = vmul.f32 %v671, 1.442695
    %v682 = vpow.pop %v681
    %v683 = vmul.f32 %v672, 1.442695
    %v684 = vpow.pop %v683
    %v685 = vmul.f32 %v673, 1.442695
    %v686 = vpow.pop %v685
    %v687 = vmul.f32 %v674, 1.442695
    %v688 = vpow.pop %v687
    %v689 = vmul.f32 %v675, 1.442695
    %v690 = vpow.pop %v689
    %v691 = vmul.f32 %v676, 1.442695
    %v692 = vpow.pop %v691
    %693 = vadd.xlane.f32.xlu0 %v678
    %v694 = vpop.xlane.xlu0 %693
    %695 = vadd.xlane.f32.xlu0 %v680
    %v696 = vpop.xlane.xlu0 %695
    %697 = vadd.xlane.f32.xlu0 %v682
    %v698 = vpop.xlane.xlu0 %697
    %699 = vadd.xlane.f32.xlu0 %v684
    %v700 = vpop.xlane.xlu0 %699
    %701 = vadd.xlane.f32.xlu0 %v686
    %v702 = vpop.xlane.xlu0 %701
    %703 = vadd.xlane.f32.xlu0 %v688
    %v704 = vpop.xlane.xlu0 %703
    %705 = vadd.xlane.f32.xlu0 %v690
    %v706 = vpop.xlane.xlu0 %705
    %707 = vadd.xlane.f32.xlu0 %v692
    %v708 = vpop.xlane.xlu0 %707
    %v709 = vrcp.pop %v694
    %v710 = vmul.f32 %v694, %v709
    %v711 = vsub.f32 1.0, %v710
    %v712 = vmul.f32 %v709, %v711
    %v713 = vadd.f32 %v709, %v712
    %vm714 = vweird.f32 %v694
    %vm715 = vweird.f32 %v709
    %vm716 = vmor %vm714, %vm715
    %v717 = vsel %vm716, %v709, %v713
    %v718 = vand.u32 2147483647, %v694
    %vm719 = vcmp.eq.f32.partialorder %v718, 8.507059e+37
    %v720 = vand.u32 %v694, 2147483648
    %v721 = vor.u32 1.1754944e-38, %v720
    %v722 = vsel %vm719, %v721, %v717
    %v723 = vmul.f32 1.0, %v722
    %v724 = vrcp.pop %v696
    %v725 = vmul.f32 %v696, %v724
    %v726 = vsub.f32 1.0, %v725
    %v727 = vmul.f32 %v724, %v726
    %v728 = vadd.f32 %v724, %v727
    %vm729 = vweird.f32 %v696
    %vm730 = vweird.f32 %v724
    %vm731 = vmor %vm729, %vm730
    %v732 = vsel %vm731, %v724, %v728
    %v733 = vand.u32 2147483647, %v696
    %vm734 = vcmp.eq.f32.partialorder %v733, 8.507059e+37
    %v735 = vand.u32 %v696, 2147483648
    %v736 = vor.u32 1.1754944e-38, %v735
    %v737 = vsel %vm734, %v736, %v732
    %v738 = vmul.f32 1.0, %v737
    %v739 = vrcp.pop %v698
    %v740 = vmul.f32 %v698, %v739
    %v741 = vsub.f32 1.0, %v740
    %v742 = vmul.f32 %v739, %v741
    %v743 = vadd.f32 %v739, %v742
    %vm744 = vweird.f32 %v698
    %vm745 = vweird.f32 %v739
    %vm746 = vmor %vm744, %vm745
    %v747 = vsel %vm746, %v739, %v743
    %v748 = vand.u32 2147483647, %v698
    %vm749 = vcmp.eq.f32.partialorder %v748, 8.507059e+37
    %v750 = vand.u32 %v698, 2147483648
    %v751 = vor.u32 1.1754944e-38, %v750
    %v752 = vsel %vm749, %v751, %v747
    %v753 = vmul.f32 1.0, %v752
    %v754 = vrcp.pop %v700
    %v755 = vmul.f32 %v700, %v754
    %v756 = vsub.f32 1.0, %v755
    %v757 = vmul.f32 %v754, %v756
    %v758 = vadd.f32 %v754, %v757
    %vm759 = vweird.f32 %v700
    %vm760 = vweird.f32 %v754
    %vm761 = vmor %vm759, %vm760
    %v762 = vsel %vm761, %v754, %v758
    %v763 = vand.u32 2147483647, %v700
    %vm764 = vcmp.eq.f32.partialorder %v763, 8.507059e+37
    %v765 = vand.u32 %v700, 2147483648
    %v766 = vor.u32 1.1754944e-38, %v765
    %v767 = vsel %vm764, %v766, %v762
    %v768 = vmul.f32 1.0, %v767
    %v769 = vrcp.pop %v702
    %v770 = vmul.f32 %v702, %v769
    %v771 = vsub.f32 1.0, %v770
    %v772 = vmul.f32 %v769, %v771
    %v773 = vadd.f32 %v769, %v772
    %vm774 = vweird.f32 %v702
    %vm775 = vweird.f32 %v769
    %vm776 = vmor %vm774, %vm775
    %v777 = vsel %vm776, %v769, %v773
    %v778 = vand.u32 2147483647, %v702
    %vm779 = vcmp.eq.f32.partialorder %v778, 8.507059e+37
    %v780 = vand.u32 %v702, 2147483648
    %v781 = vor.u32 1.1754944e-38, %v780
    %v782 = vsel %vm779, %v781, %v777
    %v783 = vmul.f32 1.0, %v782
    %v784 = vrcp.pop %v704
    %v785 = vmul.f32 %v704, %v784
    %v786 = vsub.f32 1.0, %v785
    %v787 = vmul.f32 %v784, %v786
    %v788 = vadd.f32 %v784, %v787
    %vm789 = vweird.f32 %v704
    %vm790 = vweird.f32 %v784
    %vm791 = vmor %vm789, %vm790
    %v792 = vsel %vm791, %v784, %v788
    %v793 = vand.u32 2147483647, %v704
    %vm794 = vcmp.eq.f32.partialorder %v793, 8.507059e+37
    %v795 = vand.u32 %v704, 2147483648
    %v796 = vor.u32 1.1754944e-38, %v795
    %v797 = vsel %vm794, %v796, %v792
    %v798 = vmul.f32 1.0, %v797
    %v799 = vrcp.pop %v706
    %v800 = vmul.f32 %v706, %v799
    %v801 = vsub.f32 1.0, %v800
    %v802 = vmul.f32 %v799, %v801
    %v803 = vadd.f32 %v799, %v802
    %vm804 = vweird.f32 %v706
    %vm805 = vweird.f32 %v799
    %vm806 = vmor %vm804, %vm805
    %v807 = vsel %vm806, %v799, %v803
    %v808 = vand.u32 2147483647, %v706
    %vm809 = vcmp.eq.f32.partialorder %v808, 8.507059e+37
    %v810 = vand.u32 %v706, 2147483648
    %v811 = vor.u32 1.1754944e-38, %v810
    %v812 = vsel %vm809, %v811, %v807
    %v813 = vmul.f32 1.0, %v812
    %v814 = vrcp.pop %v708
    %v815 = vmul.f32 %v708, %v814
    %v816 = vsub.f32 1.0, %v815
    %v817 = vmul.f32 %v814, %v816
    %v818 = vadd.f32 %v814, %v817
    %vm819 = vweird.f32 %v708
    %vm820 = vweird.f32 %v814
    %vm821 = vmor %vm819, %vm820
    %v822 = vsel %vm821, %v814, %v818
    %v823 = vand.u32 2147483647, %v708
    %vm824 = vcmp.eq.f32.partialorder %v823, 8.507059e+37
    %v825 = vand.u32 %v708, 2147483648
    %v826 = vor.u32 1.1754944e-38, %v825
    %v827 = vsel %vm824, %v826, %v822
    %v828 = vmul.f32 1.0, %v827
    %v829 = vmul.f32 %v678, %v723
    %v830 = vmul.f32 %v680, %v738
    %v831 = vmul.f32 %v682, %v753
    %v832 = vmul.f32 %v684, %v768
    %v833 = vmul.f32 %v686, %v783
    %v834 = vmul.f32 %v688, %v798
    %v835 = vmul.f32 %v690, %v813
    %v836 = vmul.f32 %v692, %v828
    %v837 = vld [vmem:[#allocation8] sm:$0xff]
    %v838 = vld [vmem:[#allocation8 + $0x8] sm:$0xff]
    %v839 = vld [vmem:[#allocation8 + $0x10] sm:$0xff]
    %v840 = vld [vmem:[#allocation8 + $0x18] sm:$0xff]
    %v841 = vld [vmem:[#allocation8 + $0x20] sm:$0xff]
    %v842 = vld [vmem:[#allocation8 + $0x28] sm:$0xff]
    %v843 = vld [vmem:[#allocation8 + $0x30] sm:$0xff]
    %v844 = vld [vmem:[#allocation8 + $0x38] sm:$0xff]
    %v845 = vld [vmem:[#allocation8 + $0x40] sm:$0xff]
    %v846 = vld [vmem:[#allocation8 + $0x48] sm:$0xff]
    %v847 = vld [vmem:[#allocation8 + $0x50] sm:$0xff]
    %v848 = vld [vmem:[#allocation8 + $0x58] sm:$0xff]
    %v849 = vld [vmem:[#allocation8 + $0x60] sm:$0xff]
    %v850 = vld [vmem:[#allocation8 + $0x68] sm:$0xff]
    %v851 = vld [vmem:[#allocation8 + $0x70] sm:$0xff]
    %v852 = vld [vmem:[#allocation8 + $0x78] sm:$0xff]
    %v853 = vand.u32 %v852, 4294901760
    %854 = vmatpush.msra.mxu0 %v853
    %v855 = vand.u32 %v851, 4294901760
    %856 = vmatpush.msra.mxu0 %v855
    %v857 = vand.u32 %v850, 4294901760
    %858 = vmatpush.msra.mxu0 %v857
    %v859 = vand.u32 %v849, 4294901760
    %860 = vmatpush.msra.mxu0 %v859
    %v861 = vand.u32 %v848, 4294901760
    %862 = vmatpush.msra.mxu0 %v861
    %v863 = vand.u32 %v847, 4294901760
    %864 = vmatpush.msra.mxu0 %v863
    %v865 = vand.u32 %v846, 4294901760
    %866 = vmatpush.msra.mxu0 %v865
    %v867 = vand.u32 %v845, 4294901760
    %868 = vmatpush.msra.mxu0 %v867
    %v869 = vand.u32 %v844, 4294901760
    %870 = vmatpush.msra.mxu0 %v869
    %v871 = vand.u32 %v843, 4294901760
    %872 = vmatpush.msra.mxu0 %v871
    %v873 = vand.u32 %v842, 4294901760
    %874 = vmatpush.msra.mxu0 %v873
    %v875 = vand.u32 %v841, 4294901760
    %876 = vmatpush.msra.mxu0 %v875
    %v877 = vand.u32 %v840, 4294901760
    %878 = vmatpush.msra.mxu0 %v877
    %v879 = vand.u32 %v839, 4294901760
    %880 = vmatpush.msra.mxu0 %v879
    %v881 = vand.u32 %v838, 4294901760
    %882 = vmatpush.msra.mxu0 %v881
    %v883 = vand.u32 %v837, 4294901760
    %884 = vmatpush.msra.mxu0 %v883
    %v885 = vand.u32 %v829, 4294901760
    %v886 = vsub.f32 %v829, %v885
    %v887 = vand.u32 %v886, 4294901760
    %v888 = vsub.f32 %v886, %v887
    %v889 = vand.u32 %v888, 4294901760
    %890 = vmatmul.f32.gmra.mxu0 %v889
    %v891 = vpop.f32.mrf.mxu0
    %v892 = vadd.f32 0.0, %v891
    %v893 = vand.u32 %v830, 4294901760
    %v894 = vsub.f32 %v830, %v893
    %v895 = vand.u32 %v894, 4294901760
    %v896 = vsub.f32 %v894, %v895
    %v897 = vand.u32 %v896, 4294901760
    %898 = vmatmul.f32.gmra.mxu0 %v897
    %v899 = vpop.f32.mrf.mxu0
    %v900 = vadd.f32 0.0, %v899
    %v901 = vand.u32 %v831, 4294901760
    %v902 = vsub.f32 %v831, %v901
    %v903 = vand.u32 %v902, 4294901760
    %v904 = vsub.f32 %v902, %v903
    %v905 = vand.u32 %v904, 4294901760
    %906 = vmatmul.f32.gmra.mxu0 %v905
    %v907 = vpop.f32.mrf.mxu0
    %v908 = vadd.f32 0.0, %v907
    %v909 = vand.u32 %v832, 4294901760
    %v910 = vsub.f32 %v832, %v909
    %v911 = vand.u32 %v910, 4294901760
    %v912 = vsub.f32 %v910, %v911
    %v913 = vand.u32 %v912, 4294901760
    %914 = vmatmul.f32.gmra.mxu0 %v913
    %v915 = vpop.f32.mrf.mxu0
    %v916 = vadd.f32 0.0, %v915
    %v917 = vand.u32 %v833, 4294901760
    %v918 = vsub.f32 %v833, %v917
    %v919 = vand.u32 %v918, 4294901760
    %v920 = vsub.f32 %v918, %v919
    %v921 = vand.u32 %v920, 4294901760
    %922 = vmatmul.f32.gmra.mxu0 %v921
    %v923 = vpop.f32.mrf.mxu0
    %v924 = vadd.f32 0.0, %v923
    %v925 = vand.u32 %v834, 4294901760
    %v926 = vsub.f32 %v834, %v925
    %v927 = vand.u32 %v926, 4294901760
    %v928 = vsub.f32 %v926, %v927
    %v929 = vand.u32 %v928, 4294901760
    %930 = vmatmul.f32.gmra.mxu0 %v929
    %v931 = vpop.f32.mrf.mxu0
    %v932 = vadd.f32 0.0, %v931
    %v933 = vand.u32 %v835, 4294901760
    %v934 = vsub.f32 %v835, %v933
    %v935 = vand.u32 %v934, 4294901760
    %v936 = vsub.f32 %v934, %v935
    %v937 = vand.u32 %v936, 4294901760
    %938 = vmatmul.f32.gmra.mxu0 %v937
    %v939 = vpop.f32.mrf.mxu0
    %v940 = vadd.f32 0.0, %v939
    %v941 = vand.u32 %v836, 4294901760
    %v942 = vsub.f32 %v836, %v941
    %v943 = vand.u32 %v942, 4294901760
    %v944 = vsub.f32 %v942, %v943
    %v945 = vand.u32 %v944, 4294901760
    %946 = vmatmul.f32.gmra.mxu0 %v945
    %v947 = vpop.f32.mrf.mxu0
    %v948 = vadd.f32 0.0, %v947
    %949 = vdwg.mxu0
    %v950 = vand.u32 %v852, 4294901760
    %v951 = vsub.f32 %v852, %v950
    %v952 = vand.u32 %v951, 4294901760
    %v953 = vsub.f32 %v951, %v952
    %v954 = vand.u32 %v953, 4294901760
    %955 = vmatpush.msra.mxu0 %v954
    %v956 = vand.u32 %v851, 4294901760
    %v957 = vsub.f32 %v851, %v956
    %v958 = vand.u32 %v957, 4294901760
    %v959 = vsub.f32 %v957, %v958
    %v960 = vand.u32 %v959, 4294901760
    %961 = vmatpush.msra.mxu0 %v960
    %v962 = vand.u32 %v850, 4294901760
    %v963 = vsub.f32 %v850, %v962
    %v964 = vand.u32 %v963, 4294901760
    %v965 = vsub.f32 %v963, %v964
    %v966 = vand.u32 %v965, 4294901760
    %967 = vmatpush.msra.mxu0 %v966
    %v968 = vand.u32 %v849, 4294901760
    %v969 = vsub.f32 %v849, %v968
    %v970 = vand.u32 %v969, 4294901760
    %v971 = vsub.f32 %v969, %v970
    %v972 = vand.u32 %v971, 4294901760
    %973 = vmatpush.msra.mxu0 %v972
    %v974 = vand.u32 %v848, 4294901760
    %v975 = vsub.f32 %v848, %v974
    %v976 = vand.u32 %v975, 4294901760
    %v977 = vsub.f32 %v975, %v976
    %v978 = vand.u32 %v977, 4294901760
    %979 = vmatpush.msra.mxu0 %v978
    %v980 = vand.u32 %v847, 4294901760
    %v981 = vsub.f32 %v847, %v980
    %v982 = vand.u32 %v981, 4294901760
    %v983 = vsub.f32 %v981, %v982
    %v984 = vand.u32 %v983, 4294901760
    %985 = vmatpush.msra.mxu0 %v984
    %v986 = vand.u32 %v846, 4294901760
    %v987 = vsub.f32 %v846, %v986
    %v988 = vand.u32 %v987, 4294901760
    %v989 = vsub.f32 %v987, %v988
    %v990 = vand.u32 %v989, 4294901760
    %991 = vmatpush.msra.mxu0 %v990
    %v992 = vand.u32 %v845, 4294901760
    %v993 = vsub.f32 %v845, %v992
    %v994 = vand.u32 %v993, 4294901760
    %v995 = vsub.f32 %v993, %v994
    %v996 = vand.u32 %v995, 4294901760
    %997 = vmatpush.msra.mxu0 %v996
    %v998 = vand.u32 %v844, 4294901760
    %v999 = vsub.f32 %v844, %v998
    %v1000 = vand.u32 %v999, 4294901760
    %v1001 = vsub.f32 %v999, %v1000
    %v1002 = vand.u32 %v1001, 4294901760
    %1003 = vmatpush.msra.mxu0 %v1002
    %v1004 = vand.u32 %v843, 4294901760
    %v1005 = vsub.f32 %v843, %v1004
    %v1006 = vand.u32 %v1005, 4294901760
    %v1007 = vsub.f32 %v1005, %v1006
    %v1008 = vand.u32 %v1007, 4294901760
    %1009 = vmatpush.msra.mxu0 %v1008
    %v1010 = vand.u32 %v842, 4294901760
    %v1011 = vsub.f32 %v842, %v1010
    %v1012 = vand.u32 %v1011, 4294901760
    %v1013 = vsub.f32 %v1011, %v1012
    %v1014 = vand.u32 %v1013, 4294901760
    %1015 = vmatpush.msra.mxu0 %v1014
    %v1016 = vand.u32 %v841, 4294901760
    %v1017 = vsub.f32 %v841, %v1016
    %v1018 = vand.u32 %v1017, 4294901760
    %v1019 = vsub.f32 %v1017, %v1018
    %v1020 = vand.u32 %v1019, 4294901760
    %1021 = vmatpush.msra.mxu0 %v1020
    %v1022 = vand.u32 %v840, 4294901760
    %v1023 = vsub.f32 %v840, %v1022
    %v1024 = vand.u32 %v1023, 4294901760
    %v1025 = vsub.f32 %v1023, %v1024
    %v1026 = vand.u32 %v1025, 4294901760
    %1027 = vmatpush.msra.mxu0 %v1026
    %v1028 = vand.u32 %v839, 4294901760
    %v1029 = vsub.f32 %v839, %v1028
    %v1030 = vand.u32 %v1029, 4294901760
    %v1031 = vsub.f32 %v1029, %v1030
    %v1032 = vand.u32 %v1031, 4294901760
    %1033 = vmatpush.msra.mxu0 %v1032
    %v1034 = vand.u32 %v838, 4294901760
    %v1035 = vsub.f32 %v838, %v1034
    %v1036 = vand.u32 %v1035, 4294901760
    %v1037 = vsub.f32 %v1035, %v1036
    %v1038 = vand.u32 %v1037, 4294901760
    %1039 = vmatpush.msra.mxu0 %v1038
    %v1040 = vand.u32 %v837, 4294901760
    %v1041 = vsub.f32 %v837, %v1040
    %v1042 = vand.u32 %v1041, 4294901760
    %v1043 = vsub.f32 %v1041, %v1042
    %v1044 = vand.u32 %v1043, 4294901760
    %1045 = vmatpush.msra.mxu0 %v1044
    %v1046 = vand.u32 %v829, 4294901760
    %1047 = vmatmul.f32.gmra.mxu0 %v1046
    %v1048 = vpop.f32.mrf.mxu0
    %v1049 = vadd.f32 %v892, %v1048
    %v1050 = vand.u32 %v830, 4294901760
    %1051 = vmatmul.f32.gmra.mxu0 %v1050
    %v1052 = vpop.f32.mrf.mxu0
    %v1053 = vadd.f32 %v900, %v1052
    %v1054 = vand.u32 %v831, 4294901760
    %1055 = vmatmul.f32.gmra.mxu0 %v1054
    %v1056 = vpop.f32.mrf.mxu0
    %v1057 = vadd.f32 %v908, %v1056
    %v1058 = vand.u32 %v832, 4294901760
    %1059 = vmatmul.f32.gmra.mxu0 %v1058
    %v1060 = vpop.f32.mrf.mxu0
    %v1061 = vadd.f32 %v916, %v1060
    %v1062 = vand.u32 %v833, 4294901760
    %1063 = vmatmul.f32.gmra.mxu0 %v1062
    %v1064 = vpop.f32.mrf.mxu0
    %v1065 = vadd.f32 %v924, %v1064
    %v1066 = vand.u32 %v834, 4294901760
    %1067 = vmatmul.f32.gmra.mxu0 %v1066
    %v1068 = vpop.f32.mrf.mxu0
    %v1069 = vadd.f32 %v932, %v1068
    %v1070 = vand.u32 %v835, 4294901760
    %1071 = vmatmul.f32.gmra.mxu0 %v1070
    %v1072 = vpop.f32.mrf.mxu0
    %v1073 = vadd.f32 %v940, %v1072
    %v1074 = vand.u32 %v836, 4294901760
    %1075 = vmatmul.f32.gmra.mxu0 %v1074
    %v1076 = vpop.f32.mrf.mxu0
    %v1077 = vadd.f32 %v948, %v1076
    %1078 = vdwg.mxu0
    %v1079 = vand.u32 %v852, 4294901760
    %v1080 = vsub.f32 %v852, %v1079
    %1081 = vmatpush.msra.mxu0 %v1080
    %v1082 = vand.u32 %v851, 4294901760
    %v1083 = vsub.f32 %v851, %v1082
    %1084 = vmatpush.msra.mxu0 %v1083
    %v1085 = vand.u32 %v850, 4294901760
    %v1086 = vsub.f32 %v850, %v1085
    %1087 = vmatpush.msra.mxu0 %v1086
    %v1088 = vand.u32 %v849, 4294901760
    %v1089 = vsub.f32 %v849, %v1088
    %1090 = vmatpush.msra.mxu0 %v1089
    %v1091 = vand.u32 %v848, 4294901760
    %v1092 = vsub.f32 %v848, %v1091
    %1093 = vmatpush.msra.mxu0 %v1092
    %v1094 = vand.u32 %v847, 4294901760
    %v1095 = vsub.f32 %v847, %v1094
    %1096 = vmatpush.msra.mxu0 %v1095
    %v1097 = vand.u32 %v846, 4294901760
    %v1098 = vsub.f32 %v846, %v1097
    %1099 = vmatpush.msra.mxu0 %v1098
    %v1100 = vand.u32 %v845, 4294901760
    %v1101 = vsub.f32 %v845, %v1100
    %1102 = vmatpush.msra.mxu0 %v1101
    %v1103 = vand.u32 %v844, 4294901760
    %v1104 = vsub.f32 %v844, %v1103
    %1105 = vmatpush.msra.mxu0 %v1104
    %v1106 = vand.u32 %v843, 4294901760
    %v1107 = vsub.f32 %v843, %v1106
    %1108 = vmatpush.msra.mxu0 %v1107
    %v1109 = vand.u32 %v842, 4294901760
    %v1110 = vsub.f32 %v842, %v1109
    %1111 = vmatpush.msra.mxu0 %v1110
    %v1112 = vand.u32 %v841, 4294901760
    %v1113 = vsub.f32 %v841, %v1112
    %1114 = vmatpush.msra.mxu0 %v1113
    %v1115 = vand.u32 %v840, 4294901760
    %v1116 = vsub.f32 %v840, %v1115
    %1117 = vmatpush.msra.mxu0 %v1116
    %v1118 = vand.u32 %v839, 4294901760
    %v1119 = vsub.f32 %v839, %v1118
    %1120 = vmatpush.msra.mxu0 %v1119
    %v1121 = vand.u32 %v838, 4294901760
    %v1122 = vsub.f32 %v838, %v1121
    %1123 = vmatpush.msra.mxu0 %v1122
    %v1124 = vand.u32 %v837, 4294901760
    %v1125 = vsub.f32 %v837, %v1124
    %1126 = vmatpush.msra.mxu0 %v1125
    %v1127 = vand.u32 %v829, 4294901760
    %v1128 = vsub.f32 %v829, %v1127
    %1129 = vmatmul.f32.gmra.mxu0 %v1128
    %v1130 = vpop.f32.mrf.mxu0
    %v1131 = vadd.f32 %v1049, %v1130
    %v1132 = vand.u32 %v830, 4294901760
    %v1133 = vsub.f32 %v830, %v1132
    %1134 = vmatmul.f32.gmra.mxu0 %v1133
    %v1135 = vpop.f32.mrf.mxu0
    %v1136 = vadd.f32 %v1053, %v1135
    %v1137 = vand.u32 %v831, 4294901760
    %v1138 = vsub.f32 %v831, %v1137
    %1139 = vmatmul.f32.gmra.mxu0 %v1138
    %v1140 = vpop.f32.mrf.mxu0
    %v1141 = vadd.f32 %v1057, %v1140
    %v1142 = vand.u32 %v832, 4294901760
    %v1143 = vsub.f32 %v832, %v1142
    %1144 = vmatmul.f32.gmra.mxu0 %v1143
    %v1145 = vpop.f32.mrf.mxu0
    %v1146 = vadd.f32 %v1061, %v1145
    %v1147 = vand.u32 %v833, 4294901760
    %v1148 = vsub.f32 %v833, %v1147
    %1149 = vmatmul.f32.gmra.mxu0 %v1148
    %v1150 = vpop.f32.mrf.mxu0
    %v1151 = vadd.f32 %v1065, %v1150
    %v1152 = vand.u32 %v834, 4294901760
    %v1153 = vsub.f32 %v834, %v1152
    %1154 = vmatmul.f32.gmra.mxu0 %v1153
    %v1155 = vpop.f32.mrf.mxu0
    %v1156 = vadd.f32 %v1069, %v1155
    %v1157 = vand.u32 %v835, 4294901760
    %v1158 = vsub.f32 %v835, %v1157
    %1159 = vmatmul.f32.gmra.mxu0 %v1158
    %v1160 = vpop.f32.mrf.mxu0
    %v1161 = vadd.f32 %v1073, %v1160
    %v1162 = vand.u32 %v836, 4294901760
    %v1163 = vsub.f32 %v836, %v1162
    %1164 = vmatmul.f32.gmra.mxu0 %v1163
    %v1165 = vpop.f32.mrf.mxu0
    %v1166 = vadd.f32 %v1077, %v1165
    %1167 = vdwg.mxu0
    %v1168 = vand.u32 %v852, 4294901760
    %1169 = vmatpush.msra.mxu0 %v1168
    %v1170 = vand.u32 %v851, 4294901760
    %1171 = vmatpush.msra.mxu0 %v1170
    %v1172 = vand.u32 %v850, 4294901760
    %1173 = vmatpush.msra.mxu0 %v1172
    %v1174 = vand.u32 %v849, 4294901760
    %1175 = vmatpush.msra.mxu0 %v1174
    %v1176 = vand.u32 %v848, 4294901760
    %1177 = vmatpush.msra.mxu0 %v1176
    %v1178 = vand.u32 %v847, 4294901760
    %1179 = vmatpush.msra.mxu0 %v1178
    %v1180 = vand.u32 %v846, 4294901760
    %1181 = vmatpush.msra.mxu0 %v1180
    %v1182 = vand.u32 %v845, 4294901760
    %1183 = vmatpush.msra.mxu0 %v1182
    %v1184 = vand.u32 %v844, 4294901760
    %1185 = vmatpush.msra.mxu0 %v1184
    %v1186 = vand.u32 %v843, 4294901760
    %1187 = vmatpush.msra.mxu0 %v1186
    %v1188 = vand.u32 %v842, 4294901760
    %1189 = vmatpush.msra.mxu0 %v1188
    %v1190 = vand.u32 %v841, 4294901760
    %1191 = vmatpush.msra.mxu0 %v1190
    %v1192 = vand.u32 %v840, 4294901760
    %1193 = vmatpush.msra.mxu0 %v1192
    %v1194 = vand.u32 %v839, 4294901760
    %1195 = vmatpush.msra.mxu0 %v1194
    %v1196 = vand.u32 %v838, 4294901760
    %1197 = vmatpush.msra.mxu0 %v1196
    %v1198 = vand.u32 %v837, 4294901760
    %1199 = vmatpush.msra.mxu0 %v1198
    %v1200 = vand.u32 %v829, 4294901760
    %v1201 = vsub.f32 %v829, %v1200
    %v1202 = vand.u32 %v1201, 4294901760
    %1203 = vmatmul.f32.gmra.mxu0 %v1202
    %v1204 = vpop.f32.mrf.mxu0
    %v1205 = vadd.f32 %v1131, %v1204
    %v1206 = vand.u32 %v830, 4294901760
    %v1207 = vsub.f32 %v830, %v1206
    %v1208 = vand.u32 %v1207, 4294901760
    %1209 = vmatmul.f32.gmra.mxu0 %v1208
    %v1210 = vpop.f32.mrf.mxu0
    %v1211 = vadd.f32 %v1136, %v1210
    %v1212 = vand.u32 %v831, 4294901760
    %v1213 = vsub.f32 %v831, %v1212
    %v1214 = vand.u32 %v1213, 4294901760
    %1215 = vmatmul.f32.gmra.mxu0 %v1214
    %v1216 = vpop.f32.mrf.mxu0
    %v1217 = vadd.f32 %v1141, %v1216
    %v1218 = vand.u32 %v832, 4294901760
    %v1219 = vsub.f32 %v832, %v1218
    %v1220 = vand.u32 %v1219, 4294901760
    %1221 = vmatmul.f32.gmra.mxu0 %v1220
    %v1222 = vpop.f32.mrf.mxu0
    %v1223 = vadd.f32 %v1146, %v1222
    %v1224 = vand.u32 %v833, 4294901760
    %v1225 = vsub.f32 %v833, %v1224
    %v1226 = vand.u32 %v1225, 4294901760
    %1227 = vmatmul.f32.gmra.mxu0 %v1226
    %v1228 = vpop.f32.mrf.mxu0
    %v1229 = vadd.f32 %v1151, %v1228
    %v1230 = vand.u32 %v834, 4294901760
    %v1231 = vsub.f32 %v834, %v1230
    %v1232 = vand.u32 %v1231, 4294901760
    %1233 = vmatmul.f32.gmra.mxu0 %v1232
    %v1234 = vpop.f32.mrf.mxu0
    %v1235 = vadd.f32 %v1156, %v1234
    %v1236 = vand.u32 %v835, 4294901760
    %v1237 = vsub.f32 %v835, %v1236
    %v1238 = vand.u32 %v1237, 4294901760
    %1239 = vmatmul.f32.gmra.mxu0 %v1238
    %v1240 = vpop.f32.mrf.mxu0
    %v1241 = vadd.f32 %v1161, %v1240
    %v1242 = vand.u32 %v836, 4294901760
    %v1243 = vsub.f32 %v836, %v1242
    %v1244 = vand.u32 %v1243, 4294901760
    %1245 = vmatmul.f32.gmra.mxu0 %v1244
    %v1246 = vpop.f32.mrf.mxu0
    %v1247 = vadd.f32 %v1166, %v1246
    %1248 = vdwg.mxu0
    %v1249 = vand.u32 %v852, 4294901760
    %v1250 = vsub.f32 %v852, %v1249
    %v1251 = vand.u32 %v1250, 4294901760
    %1252 = vmatpush.msra.mxu0 %v1251
    %v1253 = vand.u32 %v851, 4294901760
    %v1254 = vsub.f32 %v851, %v1253
    %v1255 = vand.u32 %v1254, 4294901760
    %1256 = vmatpush.msra.mxu0 %v1255
    %v1257 = vand.u32 %v850, 4294901760
    %v1258 = vsub.f32 %v850, %v1257
    %v1259 = vand.u32 %v1258, 4294901760
    %1260 = vmatpush.msra.mxu0 %v1259
    %v1261 = vand.u32 %v849, 4294901760
    %v1262 = vsub.f32 %v849, %v1261
    %v1263 = vand.u32 %v1262, 4294901760
    %1264 = vmatpush.msra.mxu0 %v1263
    %v1265 = vand.u32 %v848, 4294901760
    %v1266 = vsub.f32 %v848, %v1265
    %v1267 = vand.u32 %v1266, 4294901760
    %1268 = vmatpush.msra.mxu0 %v1267
    %v1269 = vand.u32 %v847, 4294901760
    %v1270 = vsub.f32 %v847, %v1269
    %v1271 = vand.u32 %v1270, 4294901760
    %1272 = vmatpush.msra.mxu0 %v1271
    %v1273 = vand.u32 %v846, 4294901760
    %v1274 = vsub.f32 %v846, %v1273
    %v1275 = vand.u32 %v1274, 4294901760
    %1276 = vmatpush.msra.mxu0 %v1275
    %v1277 = vand.u32 %v845, 4294901760
    %v1278 = vsub.f32 %v845, %v1277
    %v1279 = vand.u32 %v1278, 4294901760
    %1280 = vmatpush.msra.mxu0 %v1279
    %v1281 = vand.u32 %v844, 4294901760
    %v1282 = vsub.f32 %v844, %v1281
    %v1283 = vand.u32 %v1282, 4294901760
    %1284 = vmatpush.msra.mxu0 %v1283
    %v1285 = vand.u32 %v843, 4294901760
    %v1286 = vsub.f32 %v843, %v1285
    %v1287 = vand.u32 %v1286, 4294901760
    %1288 = vmatpush.msra.mxu0 %v1287
    %v1289 = vand.u32 %v842, 4294901760
    %v1290 = vsub.f32 %v842, %v1289
    %v1291 = vand.u32 %v1290, 4294901760
    %1292 = vmatpush.msra.mxu0 %v1291
    %v1293 = vand.u32 %v841, 4294901760
    %v1294 = vsub.f32 %v841, %v1293
    %v1295 = vand.u32 %v1294, 4294901760
    %1296 = vmatpush.msra.mxu0 %v1295
    %v1297 = vand.u32 %v840, 4294901760
    %v1298 = vsub.f32 %v840, %v1297
    %v1299 = vand.u32 %v1298, 4294901760
    %1300 = vmatpush.msra.mxu0 %v1299
    %v1301 = vand.u32 %v839, 4294901760
    %v1302 = vsub.f32 %v839, %v1301
    %v1303 = vand.u32 %v1302, 4294901760
    %1304 = vmatpush.msra.mxu0 %v1303
    %v1305 = vand.u32 %v838, 4294901760
    %v1306 = vsub.f32 %v838, %v1305
    %v1307 = vand.u32 %v1306, 4294901760
    %1308 = vmatpush.msra.mxu0 %v1307
    %v1309 = vand.u32 %v837, 4294901760
    %v1310 = vsub.f32 %v837, %v1309
    %v1311 = vand.u32 %v1310, 4294901760
    %1312 = vmatpush.msra.mxu0 %v1311
    %v1313 = vand.u32 %v829, 4294901760
    %1314 = vmatmul.f32.gmra.mxu0 %v1313
    %v1315 = vpop.f32.mrf.mxu0
    %v1316 = vadd.f32 %v1205, %v1315
    %v1317 = vand.u32 %v830, 4294901760
    %1318 = vmatmul.f32.gmra.mxu0 %v1317
    %v1319 = vpop.f32.mrf.mxu0
    %v1320 = vadd.f32 %v1211, %v1319
    %v1321 = vand.u32 %v831, 4294901760
    %1322 = vmatmul.f32.gmra.mxu0 %v1321
    %v1323 = vpop.f32.mrf.mxu0
    %v1324 = vadd.f32 %v1217, %v1323
    %v1325 = vand.u32 %v832, 4294901760
    %1326 = vmatmul.f32.gmra.mxu0 %v1325
    %v1327 = vpop.f32.mrf.mxu0
    %v1328 = vadd.f32 %v1223, %v1327
    %v1329 = vand.u32 %v833, 4294901760
    %1330 = vmatmul.f32.gmra.mxu0 %v1329
    %v1331 = vpop.f32.mrf.mxu0
    %v1332 = vadd.f32 %v1229, %v1331
    %v1333 = vand.u32 %v834, 4294901760
    %1334 = vmatmul.f32.gmra.mxu0 %v1333
    %v1335 = vpop.f32.mrf.mxu0
    %v1336 = vadd.f32 %v1235, %v1335
    %v1337 = vand.u32 %v835, 4294901760
    %1338 = vmatmul.f32.gmra.mxu0 %v1337
    %v1339 = vpop.f32.mrf.mxu0
    %v1340 = vadd.f32 %v1241, %v1339
    %v1341 = vand.u32 %v836, 4294901760
    %1342 = vmatmul.f32.gmra.mxu0 %v1341
    %v1343 = vpop.f32.mrf.mxu0
    %v1344 = vadd.f32 %v1247, %v1343
    %1345 = vdwg.mxu0
    %v1346 = vand.u32 %v852, 4294901760
    %1347 = vmatpush.msra.mxu0 %v1346
    %v1348 = vand.u32 %v851, 4294901760
    %1349 = vmatpush.msra.mxu0 %v1348
    %v1350 = vand.u32 %v850, 4294901760
    %1351 = vmatpush.msra.mxu0 %v1350
    %v1352 = vand.u32 %v849, 4294901760
    %1353 = vmatpush.msra.mxu0 %v1352
    %v1354 = vand.u32 %v848, 4294901760
    %1355 = vmatpush.msra.mxu0 %v1354
    %v1356 = vand.u32 %v847, 4294901760
    %1357 = vmatpush.msra.mxu0 %v1356
    %v1358 = vand.u32 %v846, 4294901760
    %1359 = vmatpush.msra.mxu0 %v1358
    %v1360 = vand.u32 %v845, 4294901760
    %1361 = vmatpush.msra.mxu0 %v1360
    %v1362 = vand.u32 %v844, 4294901760
    %1363 = vmatpush.msra.mxu0 %v1362
    %v1364 = vand.u32 %v843, 4294901760
    %1365 = vmatpush.msra.mxu0 %v1364
    %v1366 = vand.u32 %v842, 4294901760
    %1367 = vmatpush.msra.mxu0 %v1366
    %v1368 = vand.u32 %v841, 4294901760
    %1369 = vmatpush.msra.mxu0 %v1368
    %v1370 = vand.u32 %v840, 4294901760
    %1371 = vmatpush.msra.mxu0 %v1370
    %v1372 = vand.u32 %v839, 4294901760
    %1373 = vmatpush.msra.mxu0 %v1372
    %v1374 = vand.u32 %v838, 4294901760
    %1375 = vmatpush.msra.mxu0 %v1374
    %v1376 = vand.u32 %v837, 4294901760
    %1377 = vmatpush.msra.mxu0 %v1376
    %v1378 = vand.u32 %v829, 4294901760
    %1379 = vmatmul.f32.gmra.mxu0 %v1378
    %v1380 = vpop.f32.mrf.mxu0
    %v1381 = vadd.f32 %v1316, %v1380
    %v1382 = vand.u32 %v830, 4294901760
    %1383 = vmatmul.f32.gmra.mxu0 %v1382
    %v1384 = vpop.f32.mrf.mxu0
    %v1385 = vadd.f32 %v1320, %v1384
    %v1386 = vand.u32 %v831, 4294901760
    %1387 = vmatmul.f32.gmra.mxu0 %v1386
    %v1388 = vpop.f32.mrf.mxu0
    %v1389 = vadd.f32 %v1324, %v1388
    %v1390 = vand.u32 %v832, 4294901760
    %1391 = vmatmul.f32.gmra.mxu0 %v1390
    %v1392 = vpop.f32.mrf.mxu0
    %v1393 = vadd.f32 %v1328, %v1392
    %v1394 = vand.u32 %v833, 4294901760
    %1395 = vmatmul.f32.gmra.mxu0 %v1394
    %v1396 = vpop.f32.mrf.mxu0
    %v1397 = vadd.f32 %v1332, %v1396
    %v1398 = vand.u32 %v834, 4294901760
    %1399 = vmatmul.f32.gmra.mxu0 %v1398
    %v1400 = vpop.f32.mrf.mxu0
    %v1401 = vadd.f32 %v1336, %v1400
    %v1402 = vand.u32 %v835, 4294901760
    %1403 = vmatmul.f32.gmra.mxu0 %v1402
    %v1404 = vpop.f32.mrf.mxu0
    %v1405 = vadd.f32 %v1340, %v1404
    %v1406 = vand.u32 %v836, 4294901760
    %1407 = vmatmul.f32.gmra.mxu0 %v1406
    %v1408 = vpop.f32.mrf.mxu0
    %v1409 = vadd.f32 %v1344, %v1408
    %1410 = vdwg.mxu0
    %v1411 = vld [vmem:[#allocation2] sm:$0x1]
    %v1412 = vmul.f32 %v67, %v1381
    %v1413 = vmul.f32 %v68, %v1385
    %v1414 = vmul.f32 %v69, %v1389
    %v1415 = vmul.f32 %v70, %v1393
    %v1416 = vmul.f32 %v71, %v1397
    %v1417 = vmul.f32 %v72, %v1401
    %v1418 = vmul.f32 %v73, %v1405
    %v1419 = vmul.f32 %v74, %v1409
    %v1420 = vadd.f32 %v1412, %v1413
    %v1421 = vadd.f32 %v1420, %v1414
    %v1422 = vadd.f32 %v1421, %v1415
    %v1423 = vadd.f32 %v1422, %v1416
    %v1424 = vadd.f32 %v1423, %v1417
    %v1425 = vadd.f32 %v1424, %v1418
    %v1426 = vadd.f32 %v1425, %v1419
    %v1427 = vrot.slane %v1426, 4
    %v1428 = vadd.f32 %v1426, %v1427
    %v1429 = vrot.slane %v1428, 2
    %v1430 = vadd.f32 %v1428, %v1429
    %v1431 = vrot.slane %v1430, 1
    %v1432 = vadd.f32 %v1430, %v1431
    %v1433 = vadd.f32 %v1411, %v1432
    %1434 = vst [vmem:[#allocation2] sm:$0x1] %v1433
    %v1435 = vld [vmem:[#allocation2] sm:$0x1]
    %1436 = vst [vmem:[#allocation9] sm:$0x1] %v1435
    // Predicated region
    $region30: #{tpu_custom_call.1} parent=1 // pred_check
      _
    $region31: #{tpu_custom_call.1} parent=1 // pred_check_branch
      %1438 = sbr.rel (0) target = $region33
    $region32: #{tpu_custom_call.1} parent=1 // pred_region
      %1440 = vsyncadd [#allocation5], 0
      %s1442 = sshll.u32 [#allocation9], 4
      %s1443 = int_to_ptr.vmem [resolvable:$true] %s1442
      %s1444 = sshll.u32 %s3, 4
      %s1445 = int_to_ptr.hbm [resolvable:$true] %s1444
      %1447 = dma.vmem_to_hbm [thread:$0]  %s1443, 16, %s1445, [#allocation5]
    $region33: #{tpu_custom_call.1} parent=1 // pred_fallthru
      _
    // Predicated region
    $region34: #{tpu_custom_call.1} parent=1 // pred_check
      _
    $region35: #{tpu_custom_call.1} parent=1 // pred_check_branch
      %1449 = sbr.rel (0) target = $region37
    $region36: #{tpu_custom_call.1} parent=1 // pred_region
      %1451 = dma.done [#allocation5], 16
    $region37: #{tpu_custom_call.1} parent=1 // pred_fallthru
      _
    %1452 = vsyncpa [#allocation4], 1
    %1453 = vsyncpa [#allocation7], 1
    %1454 = vsyncpa [#allocation5], 1

</llo_original>
